<compile_context>
chip_gen: v7x
topology: tpu7x:2x2x1
jax: 0.10.0
libtpu: 0.0.40
codegen_flags: <defaults>
</compile_context>

<pallas_src>
import functools

import numpy as np
import jax
import jax.numpy as jnp
from jax.experimental import pallas as pl
from jax.experimental.pallas import tpu as pltpu


def _cdiv(a, b):
    return -(-a // b)


# ----------------------------------------------------------------------------
# Pallas kernel: per-bin, per-lane partial statistics over a lane-dense slab
# ----------------------------------------------------------------------------
def _ghmc_stats_kernel(x_ref, a_ref, s_ref, c_ref, w_ref, *, bins, n_elems):
    """Accumulate per-bin / per-lane partial sums for one (TM, LANE) tile.

    x_ref : (TM, LANE)   logits (native dtype)
    a_ref : (TM, LANE)   f32 encoded info: +w (non-target), -1-w (target), 0 (pad)
    s_ref : (bins, LANE) f32 output accumulator: sum(w * bce) per bin / lane
    c_ref : (bins, LANE) f32 output accumulator: element count per bin / lane
    w_ref : (1, LANE)    f32 output accumulator: sum(w) per lane
    """
    step = pl.program_id(1)

    @pl.when(step == 0)
    def _init():
        s_ref[...] = jnp.zeros_like(s_ref)
        c_ref[...] = jnp.zeros_like(c_ref)
        w_ref[...] = jnp.zeros_like(w_ref)

    x = x_ref[...].astype(jnp.float32)
    a = a_ref[...]
    tm, lane = x.shape

    # global flat element index -> validity mask (excludes wrapper padding)
    row0 = (pl.program_id(0) * pl.num_programs(1) + step) * tm
    ridx = jax.lax.broadcasted_iota(jnp.int32, (tm, lane), 0)
    lidx = jax.lax.broadcasted_iota(jnp.int32, (tm, lane), 1)
    valid = (row0 + ridx) * lane + lidx < n_elems

    # decode sample weight + one-hot flag from the encoding (handles w == 0)
    is_tgt = a < -0.5
    w = jnp.where(is_tgt, -1.0 - a, a)              # class_weight[target[n]], 0 on pad

    # shared transcendentals: one exp / log1p feed both BCE and the sigmoid
    e = jnp.exp(-jnp.abs(x))
    log1pe = jnp.log1p(e)
    bce = jnp.maximum(x, 0.0) - jnp.where(is_tgt, x, 0.0) + log1pe
    r = 1.0 / (1.0 + e)
    sig = jnp.where(x >= 0, r, e * r)               # stable sigmoid
    g = jnp.where(is_tgt, 1.0 - sig, sig)           # |sigmoid(x) - onehot|

    # uniform-edge digitize (edges[i] = i/bins, edges[-1] += 1e-6 handled by min)
    bin_id = jnp.minimum((g * bins).astype(jnp.int32), bins - 1)
    bin_id = jnp.where(valid, bin_id, bins)         # sentinel: padding hits no bin

    wb = w * bce                                     # padding contributes 0 (w == 0)

    w_ref[...] = w_ref[...] + jnp.sum(w, axis=0, keepdims=True)
    for i in range(bins):                            # bins is small -> unrolled
        m = bin_id == i
        s_ref[pl.ds(i, 1), :] = s_ref[pl.ds(i, 1), :] + jnp.sum(
            jnp.where(m, wb, 0.0), axis=0, keepdims=True)
        c_ref[pl.ds(i, 1), :] = c_ref[pl.ds(i, 1), :] + jnp.sum(
            m.astype(jnp.float32), axis=0, keepdims=True)


def _row_map(tiles_per_core):
    def idx(core, i):
        return (core * tiles_per_core + i, 0)
    return idx


def _core_map(core, i):
    return (core, 0, 0)


# ----------------------------------------------------------------------------
# Wrapper
# ----------------------------------------------------------------------------
def ghmc_loss(pred, target, class_weight, *, bins=10, momentum=0.0,
              acc_sum=None, lane=512, tile_rows=256):
    """GHM-C loss forward. Returns loss (and updated acc_sum if momentum>0)."""
    n, c = pred.shape
    n_elems = n * c
    assert lane % 128 == 0, "lane width must be a multiple of 128"

    # ---- wrapper-side prep (tiny XLA ops; fuse under jit) --------------------
    w_s = jnp.take(class_weight.astype(jnp.float32), target.astype(jnp.int32))   # (N,)
    is_t = (jnp.arange(c, dtype=jnp.int32)[None, :]
            == target.astype(jnp.int32)[:, None])                                # (N, C)
    aux = jnp.where(is_t, (-1.0 - w_s)[:, None], w_s[:, None]).astype(jnp.float32)

    # ---- lane-dense repack: (N, C) -> (rows_pad, lane) -----------------------
    rows_needed = _cdiv(n_elems, lane)
    if rows_needed <= tile_rows:
        tm, tiles_per_core, ncores = rows_needed, 1, 1
    else:
        tm = max(8, (tile_rows // 8) * 8)
        total_tiles = _cdiv(rows_needed, tm)
        ncores = 2 if total_tiles >= 2 else 1    # v7x: 2 TCs; harmless on v5e/v6e
        tiles_per_core = _cdiv(total_tiles, ncores)
    rows_pad = ncores * tiles_per_core * tm
    pad = rows_pad * lane - n_elems

    x_pk = jnp.pad(pred.reshape(-1), (0, pad)).reshape(rows_pad, lane)   # native dtype
    a_pk = jnp.pad(aux.reshape(-1), (0, pad)).reshape(rows_pad, lane)    # f32

    kernel = functools.partial(_ghmc_stats_kernel, bins=bins, n_elems=n_elems)
    row_map = _row_map(tiles_per_core)

    s_part, c_part, w_part = pl.pallas_call(
        kernel,
        grid=(ncores, tiles_per_core),
        in_specs=[
            pl.BlockSpec((tm, lane), row_map),
            pl.BlockSpec((tm, lane), row_map),
        ],
        out_specs=[
            pl.BlockSpec((None, bins, lane), _core_map),
            pl.BlockSpec((None, bins, lane), _core_map),
            pl.BlockSpec((None, 1, lane), _core_map),
        ],
        out_shape=[
            jax.ShapeDtypeStruct((ncores, bins, lane), jnp.float32),
            jax.ShapeDtypeStruct((ncores, bins, lane), jnp.float32),
            jax.ShapeDtypeStruct((ncores, 1, lane), jnp.float32),
        ],
        compiler_params=pltpu.CompilerParams(
            dimension_semantics=("parallel", "arbitrary"),
            vmem_limit_bytes=32 * 1024 * 1024,
        ),
    )(x_pk, a_pk)

    # ---- bins-sized epilogue (fused under jit) -------------------------------
    s_sum = jnp.sum(s_part, axis=(0, 2))             # (bins,)
    cnt = jnp.sum(c_part, axis=(0, 2))               # (bins,)
    wsum = jnp.sum(w_part)                           # == torch weights.sum()

    tot = float(n_elems)
    nonempty = cnt > 0
    nb = jnp.sum(nonempty.astype(jnp.float32))
    if momentum > 0:
        assert acc_sum is not None, "momentum > 0 requires acc_sum state"
        acc_new = jnp.where(nonempty,
                            momentum * acc_sum + (1.0 - momentum) * cnt,
                            acc_sum)
        denom = acc_new
    else:
        acc_new = None
        denom = cnt
    bin_w = jnp.where(nonempty, tot / jnp.where(nonempty, denom, 1.0), 0.0)
    numer = jnp.sum(bin_w * s_sum)
    numer = jnp.where(nb > 0, numer / nb, 0.0)
    loss = numer / wsum

    if momentum > 0:
        return loss, acc_new
    return loss


# ----------------------------------------------------------------------------
# Class-weight setup (BaseLoss.reset_epoch, 're_weight' scheduler)
# ----------------------------------------------------------------------------
def make_class_weights(num_class_list, power=1.0, extra_weight=None):
    ncl = np.asarray(num_class_list, dtype=np.float64)
    c = ncl.shape[0]
    extra = np.ones(c) if extra_weight is None else np.asarray(extra_weight, np.float64)
    w = (1.0 / ncl) * extra
    w = w ** power
    w = w / np.sum(w) * c
    return jnp.asarray(w, dtype=jnp.float32)


# ----------------------------------------------------------------------------
# Pure-NumPy reference mirroring the PyTorch forward exactly
# ----------------------------------------------------------------------------
def ghmc_loss_ref(pred, target, class_weight, *, bins=10, momentum=0.0, acc_sum=None):
    pred = np.asarray(pred, np.float32)
    target = np.asarray(target)
    cw = np.asarray(class_weight, np.float32)
    n, c = pred.shape
    onehot = np.zeros((n, c), np.float32)
    onehot[np.arange(n), target] = 1.0
    weights = (cw[None, :] * onehot).sum(1)[:, None].repeat(c, axis=1)
    sig = 1.0 / (1.0 + np.exp(-pred))
    g = np.abs(sig - onehot)
    edges = np.arange(bins + 1, dtype=np.float32) / np.float32(bins)
    edges[-1] += np.float32(1e-6)
    tot = pred.size
    ghm_w = np.zeros_like(pred)
    acc = None if acc_sum is None else np.asarray(acc_sum, np.float32).copy()
    nb = 0
    for i in range(bins):
        inds = (g >= edges[i]) & (g < edges[i + 1])
        num_in_bin = inds.sum()
        if num_in_bin > 0:
            if momentum > 0:
                acc[i] = momentum * acc[i] + (1 - momentum) * num_in_bin
                ghm_w[inds] = tot / acc[i]
            else:
                ghm_w[inds] = tot / num_in_bin
            nb += 1
    if nb > 0:
        ghm_w = ghm_w / nb
    bce = np.maximum(pred, 0) - pred * onehot + np.log1p(np.exp(-np.abs(pred)))
    weighted = weights * (bce * ghm_w)
    return np.float32(weighted.sum() / weights.sum()), acc


# ----------------------------------------------------------------------------
# Demo / correctness check
# ----------------------------------------------------------------------------
if __name__ == "__main__":
    ok = True
    BINS = 10
    key = jax.random.PRNGKey(0)
    k1, k2, k3, k4 = jax.random.split(key, 4)

    # ---- case 1: small single-tile, momentum = 0 -----------------------------
    N, C = 12, 6
    pred = jax.random.normal(k1, (N, C), dtype=jnp.float32) * 2.0
    target = jax.random.randint(k2, (N,), 0, C, dtype=jnp.int32)
    class_weight = make_class_weights([100.0, 60.0, 30.0, 20.0, 10.0, 5.0])

    loss_fn = jax.jit(functools.partial(ghmc_loss, bins=BINS, momentum=0.0))
    got = jax.block_until_ready(loss_fn(pred, target, class_weight))
    want, _ = ghmc_loss_ref(pred, target, class_weight, bins=BINS, momentum=0.0)
    if not np.allclose(np.asarray(got), want, rtol=2e-4, atol=1e-5):
        ok = False
        print(f"MISMATCH case1 (single tile): kernel={got} ref={want}")

    # ---- case 2: multi-tile grid + 2-core split + padding, momentum = 0 ------
    N2, C2 = 300, 7
    pred2 = jax.random.normal(k3, (N2, C2), dtype=jnp.float32) * 2.0
    target2 = jax.random.randint(k4, (N2,), 0, C2, dtype=jnp.int32)
    cw2 = make_class_weights(np.linspace(200.0, 10.0, C2))
    loss_fn2 = jax.jit(functools.partial(ghmc_loss, bins=BINS, momentum=0.0,
                                         lane=128, tile_rows=8))
    got2 = jax.block_until_ready(loss_fn2(pred2, target2, cw2))
    want2, _ = ghmc_loss_ref(pred2, target2, cw2, bins=BINS, momentum=0.0)
    if not np.allclose(np.asarray(got2), want2, rtol=2e-4, atol=1e-5):
        ok = False
        print(f"MISMATCH case2 (tiled/2-core): kernel={got2} ref={want2}")

    # ---- case 3: momentum > 0 with EMA state acc_sum --------------------------
    acc0 = jnp.zeros((BINS,), jnp.float32)
    loss_fn3 = jax.jit(functools.partial(ghmc_loss, bins=BINS, momentum=0.75,
                                         lane=128, tile_rows=8))
    got3, acc_new = loss_fn3(pred2, target2, cw2, acc_sum=acc0)
    got3 = jax.block_until_ready(got3)
    acc_new = jax.block_until_ready(acc_new)
    want3, acc_ref = ghmc_loss_ref(pred2, target2, cw2, bins=BINS, momentum=0.75,
                                   acc_sum=np.zeros(BINS, np.float32))
    if not np.allclose(np.asarray(got3), want3, rtol=2e-4, atol=1e-5):
        ok = False
        print(f"MISMATCH case3 loss: kernel={got3} ref={want3}")
    if not np.allclose(np.asarray(acc_new), acc_ref, rtol=1e-5, atol=1e-5):
        ok = False
        print(f"MISMATCH case3 acc_sum: kernel={acc_new} ref={acc_ref}")

    if ok:
        print("KERNEL_OK")
</pallas_src>

<mosaic_0001>
module attributes {stable_mosaic.version = 11 : i64} {
  func.func @_ghmc_stats_kernel(%arg0: i32, %arg1: i32, %arg2: memref<1x512xf32, #tpu.memory_space<vmem>>, %arg3: memref<1x512xf32, #tpu.memory_space<vmem>>, %arg4: memref<1x10x512xf32, #tpu.memory_space<vmem>>, %arg5: memref<1x10x512xf32, #tpu.memory_space<vmem>>, %arg6: memref<1x1x512xf32, #tpu.memory_space<vmem>>) attributes {dimension_semantics = [#tpu.dimension_semantics<parallel>, #tpu.dimension_semantics<arbitrary>], iteration_bounds = array<i64: 1, 1>, scalar_prefetch = 0 : i64, scratch_operands = 0 : i64, tpu.core_type = #tpu.core_type<tc>, window_params = [{transform_indices = @transform_0, window_bounds = array<i64: 1, 512>}, {transform_indices = @transform_1, window_bounds = array<i64: 1, 512>}, {transform_indices = @transform_2, window_bounds = array<i64: 1, 10, 512>}, {transform_indices = @transform_3, window_bounds = array<i64: 1, 10, 512>}, {transform_indices = @transform_4, window_bounds = array<i64: 1, 1, 512>}]} {
    %c0_i32 = arith.constant 0 : i32
    %0 = arith.cmpi eq, %arg1, %c0_i32 : i32
    %1 = arith.extui %0 : i1 to i32
    %c0_i32_0 = arith.constant 0 : i32
    %2 = arith.cmpi ne, %1, %c0_i32_0 : i32
    scf.if %2 {
      %cst_165 = arith.constant 0.000000e+00 : f32
      %280 = vector.broadcast %cst_165 : f32 to vector<10x512xf32>
      %c0_166 = arith.constant 0 : index
      %c0_167 = arith.constant 0 : index
      %c0_168 = arith.constant 0 : index
      %281 = vector.load %arg4[%c0_166, %c0_167, %c0_168] : memref<1x10x512xf32, #tpu.memory_space<vmem>>, vector<1x10x512xf32>
      %282 = vector.shape_cast %281 : vector<1x10x512xf32> to vector<10x512xf32>
      %283 = vector.shape_cast %280 : vector<10x512xf32> to vector<1x10x512xf32>
      tpu.vector_store %arg4[%c0_166, %c0_167, %c0_168], %283 {strides = array<i32>} : memref<1x10x512xf32, #tpu.memory_space<vmem>>, vector<1x10x512xf32>,
      %cst_169 = arith.constant 0.000000e+00 : f32
      %284 = vector.broadcast %cst_169 : f32 to vector<10x512xf32>
      %c0_170 = arith.constant 0 : index
      %c0_171 = arith.constant 0 : index
      %c0_172 = arith.constant 0 : index
      %285 = vector.load %arg5[%c0_170, %c0_171, %c0_172] : memref<1x10x512xf32, #tpu.memory_space<vmem>>, vector<1x10x512xf32>
      %286 = vector.shape_cast %285 : vector<1x10x512xf32> to vector<10x512xf32>
      %287 = vector.shape_cast %284 : vector<10x512xf32> to vector<1x10x512xf32>
      tpu.vector_store %arg5[%c0_170, %c0_171, %c0_172], %287 {strides = array<i32>} : memref<1x10x512xf32, #tpu.memory_space<vmem>>, vector<1x10x512xf32>,
      %cst_173 = arith.constant 0.000000e+00 : f32
      %288 = vector.broadcast %cst_173 : f32 to vector<1x512xf32>
      %c0_174 = arith.constant 0 : index
      %c0_175 = arith.constant 0 : index
      %c0_176 = arith.constant 0 : index
      %289 = vector.load %arg6[%c0_174, %c0_175, %c0_176] : memref<1x1x512xf32, #tpu.memory_space<vmem>>, vector<1x1x512xf32>
      %290 = vector.shape_cast %289 : vector<1x1x512xf32> to vector<1x512xf32>
      %291 = vector.shape_cast %288 : vector<1x512xf32> to vector<1x1x512xf32>
      tpu.vector_store %arg6[%c0_174, %c0_175, %c0_176], %291 {strides = array<i32>} : memref<1x1x512xf32, #tpu.memory_space<vmem>>, vector<1x1x512xf32>,
    } else {
    }
    %c0 = arith.constant 0 : index
    %c0_1 = arith.constant 0 : index
    %3 = vector.load %arg2[%c0, %c0_1] : memref<1x512xf32, #tpu.memory_space<vmem>>, vector<1x512xf32>
    %c0_2 = arith.constant 0 : index
    %c0_3 = arith.constant 0 : index
    %4 = vector.load %arg3[%c0_2, %c0_3] : memref<1x512xf32, #tpu.memory_space<vmem>>, vector<1x512xf32>
    %c1_i32 = arith.constant 1 : i32
    %5 = arith.muli %arg0, %c1_i32 : i32
    %6 = arith.addi %5, %arg1 : i32
    %c1_i32_4 = arith.constant 1 : i32
    %7 = arith.muli %6, %c1_i32_4 : i32
    %8 = tpu.iota {dimensions = array<i32: 0>} : vector<1x512xi32>
    %9 = tpu.iota {dimensions = array<i32: 1>} : vector<1x512xi32>
    %10 = vector.broadcast %7 : i32 to vector<1x512xi32>
    %11 = arith.addi %10, %8 : vector<1x512xi32>
    %c512_i32 = arith.constant 512 : i32
    %12 = vector.broadcast %c512_i32 : i32 to vector<1x512xi32>
    %13 = arith.muli %11, %12 : vector<1x512xi32>
    %14 = arith.addi %13, %9 : vector<1x512xi32>
    %c72_i32 = arith.constant 72 : i32
    %15 = vector.broadcast %c72_i32 : i32 to vector<1x512xi32>
    %16 = arith.cmpi slt, %14, %15 : vector<1x512xi32>
    %cst = arith.constant -5.000000e-01 : f32
    %17 = vector.broadcast %cst : f32 to vector<1x512xf32>
    %18 = arith.cmpf olt, %4, %17 : vector<1x512xf32>
    %cst_5 = arith.constant -1.000000e+00 : f32
    %19 = vector.broadcast %cst_5 : f32 to vector<1x512xf32>
    %20 = arith.subf %19, %4 : vector<1x512xf32>
    %21 = arith.select %18, %20, %4 : vector<1x512xi1>, vector<1x512xf32>
    %22 = math.absf %3 : vector<1x512xf32>
    %cst_6 = arith.constant 0.000000e+00 : f32
    %23 = vector.broadcast %cst_6 : f32 to vector<1x512xf32>
    %24 = arith.subf %23, %22 : vector<1x512xf32>
    %25 = math.exp %24 : vector<1x512xf32>
    %26 = math.log1p %25 : vector<1x512xf32>
    %cst_7 = arith.constant 0.000000e+00 : f32
    %27 = vector.broadcast %cst_7 : f32 to vector<1x512xf32>
    %28 = arith.maximumf %3, %27 : vector<1x512xf32>
    %cst_8 = arith.constant 0.000000e+00 : f32
    %29 = vector.broadcast %cst_8 : f32 to vector<1x512xf32>
    %30 = arith.select %18, %3, %29 : vector<1x512xi1>, vector<1x512xf32>
    %31 = arith.subf %28, %30 : vector<1x512xf32>
    %32 = arith.addf %31, %26 : vector<1x512xf32>
    %cst_9 = arith.constant 1.000000e+00 : f32
    %33 = vector.broadcast %cst_9 : f32 to vector<1x512xf32>
    %34 = arith.addf %33, %25 : vector<1x512xf32>
    %cst_10 = arith.constant 1.000000e+00 : f32
    %35 = vector.broadcast %cst_10 : f32 to vector<1x512xf32>
    %36 = arith.divf %35, %34 : vector<1x512xf32>
    %cst_11 = arith.constant 0.000000e+00 : f32
    %37 = vector.broadcast %cst_11 : f32 to vector<1x512xf32>
    %38 = arith.cmpf oge, %3, %37 : vector<1x512xf32>
    %39 = arith.mulf %25, %36 : vector<1x512xf32>
    %40 = arith.select %38, %36, %39 : vector<1x512xi1>, vector<1x512xf32>
    %cst_12 = arith.constant 1.000000e+00 : f32
    %41 = vector.broadcast %cst_12 : f32 to vector<1x512xf32>
    %42 = arith.subf %41, %40 : vector<1x512xf32>
    %43 = arith.select %18, %42, %40 : vector<1x512xi1>, vector<1x512xf32>
    %cst_13 = arith.constant 1.000000e+01 : f32
    %44 = vector.broadcast %cst_13 : f32 to vector<1x512xf32>
    %45 = arith.mulf %43, %44 : vector<1x512xf32>
    %46 = arith.fptosi %45 : vector<1x512xf32> to vector<1x512xi32>
    %c9_i32 = arith.constant 9 : i32
    %47 = vector.broadcast %c9_i32 : i32 to vector<1x512xi32>
    %48 = arith.minsi %46, %47 : vector<1x512xi32>
    %c10_i32 = arith.constant 10 : i32
    %49 = vector.broadcast %c10_i32 : i32 to vector<1x512xi32>
    %50 = arith.select %16, %48, %49 : vector<1x512xi1>, vector<1x512xi32>
    %51 = arith.mulf %21, %32 : vector<1x512xf32>
    %c0_14 = arith.constant 0 : index
    %c0_15 = arith.constant 0 : index
    %c0_16 = arith.constant 0 : index
    %52 = vector.load %arg6[%c0_14, %c0_15, %c0_16] : memref<1x1x512xf32, #tpu.memory_space<vmem>>, vector<1x1x512xf32>
    %53 = vector.shape_cast %52 : vector<1x1x512xf32> to vector<1x512xf32>
    %cst_17 = arith.constant dense<0.000000e+00> : vector<512xf32>
    %54 = vector.multi_reduction <add>, %21, %cst_17 [0] : vector<1x512xf32> to vector<512xf32>
    %55 = vector.shape_cast %54 : vector<512xf32> to vector<1x512xf32>
    %56 = arith.addf %53, %55 : vector<1x512xf32>
    %c0_18 = arith.constant 0 : index
    %c0_19 = arith.constant 0 : index
    %c0_20 = arith.constant 0 : index
    %57 = vector.load %arg6[%c0_18, %c0_19, %c0_20] : memref<1x1x512xf32, #tpu.memory_space<vmem>>, vector<1x1x512xf32>
    %58 = vector.shape_cast %57 : vector<1x1x512xf32> to vector<1x512xf32>
    %59 = vector.shape_cast %56 : vector<1x512xf32> to vector<1x1x512xf32>
    tpu.vector_store %arg6[%c0_18, %c0_19, %c0_20], %59 {strides = array<i32>} : memref<1x1x512xf32, #tpu.memory_space<vmem>>, vector<1x1x512xf32>,
    %c0_i32_21 = arith.constant 0 : i32
    %60 = vector.broadcast %c0_i32_21 : i32 to vector<1x512xi32>
    %61 = arith.cmpi eq, %50, %60 : vector<1x512xi32>
    %c0_22 = arith.constant 0 : index
    %c0_23 = arith.constant 0 : index
    %c0_24 = arith.constant 0 : index
    %62 = vector.load %arg4[%c0_22, %c0_23, %c0_24] : memref<1x10x512xf32, #tpu.memory_space<vmem>>, vector<1x1x512xf32>
    %63 = vector.shape_cast %62 : vector<1x1x512xf32> to vector<1x512xf32>
    %cst_25 = arith.constant 0.000000e+00 : f32
    %64 = vector.broadcast %cst_25 : f32 to vector<1x512xf32>
    %65 = arith.select %61, %51, %64 : vector<1x512xi1>, vector<1x512xf32>
    %cst_26 = arith.constant dense<0.000000e+00> : vector<512xf32>
    %66 = vector.multi_reduction <add>, %65, %cst_26 [0] : vector<1x512xf32> to vector<512xf32>
    %67 = vector.shape_cast %66 : vector<512xf32> to vector<1x512xf32>
    %68 = arith.addf %63, %67 : vector<1x512xf32>
    %c0_27 = arith.constant 0 : index
    %c0_28 = arith.constant 0 : index
    %c0_29 = arith.constant 0 : index
    %69 = vector.load %arg4[%c0_27, %c0_28, %c0_29] : memref<1x10x512xf32, #tpu.memory_space<vmem>>, vector<1x1x512xf32>
    %70 = vector.shape_cast %69 : vector<1x1x512xf32> to vector<1x512xf32>
    %71 = vector.shape_cast %68 : vector<1x512xf32> to vector<1x1x512xf32>
    tpu.vector_store %arg4[%c0_27, %c0_28, %c0_29], %71 {strides = array<i32>} : memref<1x10x512xf32, #tpu.memory_space<vmem>>, vector<1x1x512xf32>,
    %c0_30 = arith.constant 0 : index
    %c0_31 = arith.constant 0 : index
    %c0_32 = arith.constant 0 : index
    %72 = vector.load %arg5[%c0_30, %c0_31, %c0_32] : memref<1x10x512xf32, #tpu.memory_space<vmem>>, vector<1x1x512xf32>
    %73 = vector.shape_cast %72 : vector<1x1x512xf32> to vector<1x512xf32>
    %74 = arith.extui %61 : vector<1x512xi1> to vector<1x512xi32>
    %75 = arith.sitofp %74 : vector<1x512xi32> to vector<1x512xf32>
    %cst_33 = arith.constant dense<0.000000e+00> : vector<512xf32>
    %76 = vector.multi_reduction <add>, %75, %cst_33 [0] : vector<1x512xf32> to vector<512xf32>
    %77 = vector.shape_cast %76 : vector<512xf32> to vector<1x512xf32>
    %78 = arith.addf %73, %77 : vector<1x512xf32>
    %c0_34 = arith.constant 0 : index
    %c0_35 = arith.constant 0 : index
    %c0_36 = arith.constant 0 : index
    %79 = vector.load %arg5[%c0_34, %c0_35, %c0_36] : memref<1x10x512xf32, #tpu.memory_space<vmem>>, vector<1x1x512xf32>
    %80 = vector.shape_cast %79 : vector<1x1x512xf32> to vector<1x512xf32>
    %81 = vector.shape_cast %78 : vector<1x512xf32> to vector<1x1x512xf32>
    tpu.vector_store %arg5[%c0_34, %c0_35, %c0_36], %81 {strides = array<i32>} : memref<1x10x512xf32, #tpu.memory_space<vmem>>, vector<1x1x512xf32>,
    %c1_i32_37 = arith.constant 1 : i32
    %82 = vector.broadcast %c1_i32_37 : i32 to vector<1x512xi32>
    %83 = arith.cmpi eq, %50, %82 : vector<1x512xi32>
    %c0_38 = arith.constant 0 : index
    %c1 = arith.constant 1 : index
    %c0_39 = arith.constant 0 : index
    %84 = vector.load %arg4[%c0_38, %c1, %c0_39] : memref<1x10x512xf32, #tpu.memory_space<vmem>>, vector<1x1x512xf32>
    %85 = vector.shape_cast %84 : vector<1x1x512xf32> to vector<1x512xf32>
    %cst_40 = arith.constant 0.000000e+00 : f32
    %86 = vector.broadcast %cst_40 : f32 to vector<1x512xf32>
    %87 = arith.select %83, %51, %86 : vector<1x512xi1>, vector<1x512xf32>
    %cst_41 = arith.constant dense<0.000000e+00> : vector<512xf32>
    %88 = vector.multi_reduction <add>, %87, %cst_41 [0] : vector<1x512xf32> to vector<512xf32>
    %89 = vector.shape_cast %88 : vector<512xf32> to vector<1x512xf32>
    %90 = arith.addf %85, %89 : vector<1x512xf32>
    %c0_42 = arith.constant 0 : index
    %c1_43 = arith.constant 1 : index
    %c0_44 = arith.constant 0 : index
    %91 = vector.load %arg4[%c0_42, %c1_43, %c0_44] : memref<1x10x512xf32, #tpu.memory_space<vmem>>, vector<1x1x512xf32>
    %92 = vector.shape_cast %91 : vector<1x1x512xf32> to vector<1x512xf32>
    %93 = vector.shape_cast %90 : vector<1x512xf32> to vector<1x1x512xf32>
    tpu.vector_store %arg4[%c0_42, %c1_43, %c0_44], %93 {strides = array<i32>} : memref<1x10x512xf32, #tpu.memory_space<vmem>>, vector<1x1x512xf32>,
    %c0_45 = arith.constant 0 : index
    %c1_46 = arith.constant 1 : index
    %c0_47 = arith.constant 0 : index
    %94 = vector.load %arg5[%c0_45, %c1_46, %c0_47] : memref<1x10x512xf32, #tpu.memory_space<vmem>>, vector<1x1x512xf32>
    %95 = vector.shape_cast %94 : vector<1x1x512xf32> to vector<1x512xf32>
    %96 = arith.extui %83 : vector<1x512xi1> to vector<1x512xi32>
    %97 = arith.sitofp %96 : vector<1x512xi32> to vector<1x512xf32>
    %cst_48 = arith.constant dense<0.000000e+00> : vector<512xf32>
    %98 = vector.multi_reduction <add>, %97, %cst_48 [0] : vector<1x512xf32> to vector<512xf32>
    %99 = vector.shape_cast %98 : vector<512xf32> to vector<1x512xf32>
    %100 = arith.addf %95, %99 : vector<1x512xf32>
    %c0_49 = arith.constant 0 : index
    %c1_50 = arith.constant 1 : index
    %c0_51 = arith.constant 0 : index
    %101 = vector.load %arg5[%c0_49, %c1_50, %c0_51] : memref<1x10x512xf32, #tpu.memory_space<vmem>>, vector<1x1x512xf32>
    %102 = vector.shape_cast %101 : vector<1x1x512xf32> to vector<1x512xf32>
    %103 = vector.shape_cast %100 : vector<1x512xf32> to vector<1x1x512xf32>
    tpu.vector_store %arg5[%c0_49, %c1_50, %c0_51], %103 {strides = array<i32>} : memref<1x10x512xf32, #tpu.memory_space<vmem>>, vector<1x1x512xf32>,
    %c2_i32 = arith.constant 2 : i32
    %104 = vector.broadcast %c2_i32 : i32 to vector<1x512xi32>
    %105 = arith.cmpi eq, %50, %104 : vector<1x512xi32>
    %c0_52 = arith.constant 0 : index
    %c2 = arith.constant 2 : index
    %c0_53 = arith.constant 0 : index
    %106 = vector.load %arg4[%c0_52, %c2, %c0_53] : memref<1x10x512xf32, #tpu.memory_space<vmem>>, vector<1x1x512xf32>
    %107 = vector.shape_cast %106 : vector<1x1x512xf32> to vector<1x512xf32>
    %cst_54 = arith.constant 0.000000e+00 : f32
    %108 = vector.broadcast %cst_54 : f32 to vector<1x512xf32>
    %109 = arith.select %105, %51, %108 : vector<1x512xi1>, vector<1x512xf32>
    %cst_55 = arith.constant dense<0.000000e+00> : vector<512xf32>
    %110 = vector.multi_reduction <add>, %109, %cst_55 [0] : vector<1x512xf32> to vector<512xf32>
    %111 = vector.shape_cast %110 : vector<512xf32> to vector<1x512xf32>
    %112 = arith.addf %107, %111 : vector<1x512xf32>
    %c0_56 = arith.constant 0 : index
    %c2_57 = arith.constant 2 : index
    %c0_58 = arith.constant 0 : index
    %113 = vector.load %arg4[%c0_56, %c2_57, %c0_58] : memref<1x10x512xf32, #tpu.memory_space<vmem>>, vector<1x1x512xf32>
    %114 = vector.shape_cast %113 : vector<1x1x512xf32> to vector<1x512xf32>
    %115 = vector.shape_cast %112 : vector<1x512xf32> to vector<1x1x512xf32>
    tpu.vector_store %arg4[%c0_56, %c2_57, %c0_58], %115 {strides = array<i32>} : memref<1x10x512xf32, #tpu.memory_space<vmem>>, vector<1x1x512xf32>,
    %c0_59 = arith.constant 0 : index
    %c2_60 = arith.constant 2 : index
    %c0_61 = arith.constant 0 : index
    %116 = vector.load %arg5[%c0_59, %c2_60, %c0_61] : memref<1x10x512xf32, #tpu.memory_space<vmem>>, vector<1x1x512xf32>
    %117 = vector.shape_cast %116 : vector<1x1x512xf32> to vector<1x512xf32>
    %118 = arith.extui %105 : vector<1x512xi1> to vector<1x512xi32>
    %119 = arith.sitofp %118 : vector<1x512xi32> to vector<1x512xf32>
    %cst_62 = arith.constant dense<0.000000e+00> : vector<512xf32>
    %120 = vector.multi_reduction <add>, %119, %cst_62 [0] : vector<1x512xf32> to vector<512xf32>
    %121 = vector.shape_cast %120 : vector<512xf32> to vector<1x512xf32>
    %122 = arith.addf %117, %121 : vector<1x512xf32>
    %c0_63 = arith.constant 0 : index
    %c2_64 = arith.constant 2 : index
    %c0_65 = arith.constant 0 : index
    %123 = vector.load %arg5[%c0_63, %c2_64, %c0_65] : memref<1x10x512xf32, #tpu.memory_space<vmem>>, vector<1x1x512xf32>
    %124 = vector.shape_cast %123 : vector<1x1x512xf32> to vector<1x512xf32>
    %125 = vector.shape_cast %122 : vector<1x512xf32> to vector<1x1x512xf32>
    tpu.vector_store %arg5[%c0_63, %c2_64, %c0_65], %125 {strides = array<i32>} : memref<1x10x512xf32, #tpu.memory_space<vmem>>, vector<1x1x512xf32>,
    %c3_i32 = arith.constant 3 : i32
    %126 = vector.broadcast %c3_i32 : i32 to vector<1x512xi32>
    %127 = arith.cmpi eq, %50, %126 : vector<1x512xi32>
    %c0_66 = arith.constant 0 : index
    %c3 = arith.constant 3 : index
    %c0_67 = arith.constant 0 : index
    %128 = vector.load %arg4[%c0_66, %c3, %c0_67] : memref<1x10x512xf32, #tpu.memory_space<vmem>>, vector<1x1x512xf32>
    %129 = vector.shape_cast %128 : vector<1x1x512xf32> to vector<1x512xf32>
    %cst_68 = arith.constant 0.000000e+00 : f32
    %130 = vector.broadcast %cst_68 : f32 to vector<1x512xf32>
    %131 = arith.select %127, %51, %130 : vector<1x512xi1>, vector<1x512xf32>
    %cst_69 = arith.constant dense<0.000000e+00> : vector<512xf32>
    %132 = vector.multi_reduction <add>, %131, %cst_69 [0] : vector<1x512xf32> to vector<512xf32>
    %133 = vector.shape_cast %132 : vector<512xf32> to vector<1x512xf32>
    %134 = arith.addf %129, %133 : vector<1x512xf32>
    %c0_70 = arith.constant 0 : index
    %c3_71 = arith.constant 3 : index
    %c0_72 = arith.constant 0 : index
    %135 = vector.load %arg4[%c0_70, %c3_71, %c0_72] : memref<1x10x512xf32, #tpu.memory_space<vmem>>, vector<1x1x512xf32>
    %136 = vector.shape_cast %135 : vector<1x1x512xf32> to vector<1x512xf32>
    %137 = vector.shape_cast %134 : vector<1x512xf32> to vector<1x1x512xf32>
    tpu.vector_store %arg4[%c0_70, %c3_71, %c0_72], %137 {strides = array<i32>} : memref<1x10x512xf32, #tpu.memory_space<vmem>>, vector<1x1x512xf32>,
    %c0_73 = arith.constant 0 : index
    %c3_74 = arith.constant 3 : index
    %c0_75 = arith.constant 0 : index
    %138 = vector.load %arg5[%c0_73, %c3_74, %c0_75] : memref<1x10x512xf32, #tpu.memory_space<vmem>>, vector<1x1x512xf32>
    %139 = vector.shape_cast %138 : vector<1x1x512xf32> to vector<1x512xf32>
    %140 = arith.extui %127 : vector<1x512xi1> to vector<1x512xi32>
    %141 = arith.sitofp %140 : vector<1x512xi32> to vector<1x512xf32>
    %cst_76 = arith.constant dense<0.000000e+00> : vector<512xf32>
    %142 = vector.multi_reduction <add>, %141, %cst_76 [0] : vector<1x512xf32> to vector<512xf32>
    %143 = vector.shape_cast %142 : vector<512xf32> to vector<1x512xf32>
    %144 = arith.addf %139, %143 : vector<1x512xf32>
    %c0_77 = arith.constant 0 : index
    %c3_78 = arith.constant 3 : index
    %c0_79 = arith.constant 0 : index
    %145 = vector.load %arg5[%c0_77, %c3_78, %c0_79] : memref<1x10x512xf32, #tpu.memory_space<vmem>>, vector<1x1x512xf32>
    %146 = vector.shape_cast %145 : vector<1x1x512xf32> to vector<1x512xf32>
    %147 = vector.shape_cast %144 : vector<1x512xf32> to vector<1x1x512xf32>
    tpu.vector_store %arg5[%c0_77, %c3_78, %c0_79], %147 {strides = array<i32>} : memref<1x10x512xf32, #tpu.memory_space<vmem>>, vector<1x1x512xf32>,
    %c4_i32 = arith.constant 4 : i32
    %148 = vector.broadcast %c4_i32 : i32 to vector<1x512xi32>
    %149 = arith.cmpi eq, %50, %148 : vector<1x512xi32>
    %c0_80 = arith.constant 0 : index
    %c4 = arith.constant 4 : index
    %c0_81 = arith.constant 0 : index
    %150 = vector.load %arg4[%c0_80, %c4, %c0_81] : memref<1x10x512xf32, #tpu.memory_space<vmem>>, vector<1x1x512xf32>
    %151 = vector.shape_cast %150 : vector<1x1x512xf32> to vector<1x512xf32>
    %cst_82 = arith.constant 0.000000e+00 : f32
    %152 = vector.broadcast %cst_82 : f32 to vector<1x512xf32>
    %153 = arith.select %149, %51, %152 : vector<1x512xi1>, vector<1x512xf32>
    %cst_83 = arith.constant dense<0.000000e+00> : vector<512xf32>
    %154 = vector.multi_reduction <add>, %153, %cst_83 [0] : vector<1x512xf32> to vector<512xf32>
    %155 = vector.shape_cast %154 : vector<512xf32> to vector<1x512xf32>
    %156 = arith.addf %151, %155 : vector<1x512xf32>
    %c0_84 = arith.constant 0 : index
    %c4_85 = arith.constant 4 : index
    %c0_86 = arith.constant 0 : index
    %157 = vector.load %arg4[%c0_84, %c4_85, %c0_86] : memref<1x10x512xf32, #tpu.memory_space<vmem>>, vector<1x1x512xf32>
    %158 = vector.shape_cast %157 : vector<1x1x512xf32> to vector<1x512xf32>
    %159 = vector.shape_cast %156 : vector<1x512xf32> to vector<1x1x512xf32>
    tpu.vector_store %arg4[%c0_84, %c4_85, %c0_86], %159 {strides = array<i32>} : memref<1x10x512xf32, #tpu.memory_space<vmem>>, vector<1x1x512xf32>,
    %c0_87 = arith.constant 0 : index
    %c4_88 = arith.constant 4 : index
    %c0_89 = arith.constant 0 : index
    %160 = vector.load %arg5[%c0_87, %c4_88, %c0_89] : memref<1x10x512xf32, #tpu.memory_space<vmem>>, vector<1x1x512xf32>
    %161 = vector.shape_cast %160 : vector<1x1x512xf32> to vector<1x512xf32>
    %162 = arith.extui %149 : vector<1x512xi1> to vector<1x512xi32>
    %163 = arith.sitofp %162 : vector<1x512xi32> to vector<1x512xf32>
    %cst_90 = arith.constant dense<0.000000e+00> : vector<512xf32>
    %164 = vector.multi_reduction <add>, %163, %cst_90 [0] : vector<1x512xf32> to vector<512xf32>
    %165 = vector.shape_cast %164 : vector<512xf32> to vector<1x512xf32>
    %166 = arith.addf %161, %165 : vector<1x512xf32>
    %c0_91 = arith.constant 0 : index
    %c4_92 = arith.constant 4 : index
    %c0_93 = arith.constant 0 : index
    %167 = vector.load %arg5[%c0_91, %c4_92, %c0_93] : memref<1x10x512xf32, #tpu.memory_space<vmem>>, vector<1x1x512xf32>
    %168 = vector.shape_cast %167 : vector<1x1x512xf32> to vector<1x512xf32>
    %169 = vector.shape_cast %166 : vector<1x512xf32> to vector<1x1x512xf32>
    tpu.vector_store %arg5[%c0_91, %c4_92, %c0_93], %169 {strides = array<i32>} : memref<1x10x512xf32, #tpu.memory_space<vmem>>, vector<1x1x512xf32>,
    %c5_i32 = arith.constant 5 : i32
    %170 = vector.broadcast %c5_i32 : i32 to vector<1x512xi32>
    %171 = arith.cmpi eq, %50, %170 : vector<1x512xi32>
    %c0_94 = arith.constant 0 : index
    %c5 = arith.constant 5 : index
    %c0_95 = arith.constant 0 : index
    %172 = vector.load %arg4[%c0_94, %c5, %c0_95] : memref<1x10x512xf32, #tpu.memory_space<vmem>>, vector<1x1x512xf32>
    %173 = vector.shape_cast %172 : vector<1x1x512xf32> to vector<1x512xf32>
    %cst_96 = arith.constant 0.000000e+00 : f32
    %174 = vector.broadcast %cst_96 : f32 to vector<1x512xf32>
    %175 = arith.select %171, %51, %174 : vector<1x512xi1>, vector<1x512xf32>
    %cst_97 = arith.constant dense<0.000000e+00> : vector<512xf32>
    %176 = vector.multi_reduction <add>, %175, %cst_97 [0] : vector<1x512xf32> to vector<512xf32>
    %177 = vector.shape_cast %176 : vector<512xf32> to vector<1x512xf32>
    %178 = arith.addf %173, %177 : vector<1x512xf32>
    %c0_98 = arith.constant 0 : index
    %c5_99 = arith.constant 5 : index
    %c0_100 = arith.constant 0 : index
    %179 = vector.load %arg4[%c0_98, %c5_99, %c0_100] : memref<1x10x512xf32, #tpu.memory_space<vmem>>, vector<1x1x512xf32>
    %180 = vector.shape_cast %179 : vector<1x1x512xf32> to vector<1x512xf32>
    %181 = vector.shape_cast %178 : vector<1x512xf32> to vector<1x1x512xf32>
    tpu.vector_store %arg4[%c0_98, %c5_99, %c0_100], %181 {strides = array<i32>} : memref<1x10x512xf32, #tpu.memory_space<vmem>>, vector<1x1x512xf32>,
    %c0_101 = arith.constant 0 : index
    %c5_102 = arith.constant 5 : index
    %c0_103 = arith.constant 0 : index
    %182 = vector.load %arg5[%c0_101, %c5_102, %c0_103] : memref<1x10x512xf32, #tpu.memory_space<vmem>>, vector<1x1x512xf32>
    %183 = vector.shape_cast %182 : vector<1x1x512xf32> to vector<1x512xf32>
    %184 = arith.extui %171 : vector<1x512xi1> to vector<1x512xi32>
    %185 = arith.sitofp %184 : vector<1x512xi32> to vector<1x512xf32>
    %cst_104 = arith.constant dense<0.000000e+00> : vector<512xf32>
    %186 = vector.multi_reduction <add>, %185, %cst_104 [0] : vector<1x512xf32> to vector<512xf32>
    %187 = vector.shape_cast %186 : vector<512xf32> to vector<1x512xf32>
    %188 = arith.addf %183, %187 : vector<1x512xf32>
    %c0_105 = arith.constant 0 : index
    %c5_106 = arith.constant 5 : index
    %c0_107 = arith.constant 0 : index
    %189 = vector.load %arg5[%c0_105, %c5_106, %c0_107] : memref<1x10x512xf32, #tpu.memory_space<vmem>>, vector<1x1x512xf32>
    %190 = vector.shape_cast %189 : vector<1x1x512xf32> to vector<1x512xf32>
    %191 = vector.shape_cast %188 : vector<1x512xf32> to vector<1x1x512xf32>
    tpu.vector_store %arg5[%c0_105, %c5_106, %c0_107], %191 {strides = array<i32>} : memref<1x10x512xf32, #tpu.memory_space<vmem>>, vector<1x1x512xf32>,
    %c6_i32 = arith.constant 6 : i32
    %192 = vector.broadcast %c6_i32 : i32 to vector<1x512xi32>
    %193 = arith.cmpi eq, %50, %192 : vector<1x512xi32>
    %c0_108 = arith.constant 0 : index
    %c6 = arith.constant 6 : index
    %c0_109 = arith.constant 0 : index
    %194 = vector.load %arg4[%c0_108, %c6, %c0_109] : memref<1x10x512xf32, #tpu.memory_space<vmem>>, vector<1x1x512xf32>
    %195 = vector.shape_cast %194 : vector<1x1x512xf32> to vector<1x512xf32>
    %cst_110 = arith.constant 0.000000e+00 : f32
    %196 = vector.broadcast %cst_110 : f32 to vector<1x512xf32>
    %197 = arith.select %193, %51, %196 : vector<1x512xi1>, vector<1x512xf32>
    %cst_111 = arith.constant dense<0.000000e+00> : vector<512xf32>
    %198 = vector.multi_reduction <add>, %197, %cst_111 [0] : vector<1x512xf32> to vector<512xf32>
    %199 = vector.shape_cast %198 : vector<512xf32> to vector<1x512xf32>
    %200 = arith.addf %195, %199 : vector<1x512xf32>
    %c0_112 = arith.constant 0 : index
    %c6_113 = arith.constant 6 : index
    %c0_114 = arith.constant 0 : index
    %201 = vector.load %arg4[%c0_112, %c6_113, %c0_114] : memref<1x10x512xf32, #tpu.memory_space<vmem>>, vector<1x1x512xf32>
    %202 = vector.shape_cast %201 : vector<1x1x512xf32> to vector<1x512xf32>
    %203 = vector.shape_cast %200 : vector<1x512xf32> to vector<1x1x512xf32>
    tpu.vector_store %arg4[%c0_112, %c6_113, %c0_114], %203 {strides = array<i32>} : memref<1x10x512xf32, #tpu.memory_space<vmem>>, vector<1x1x512xf32>,
    %c0_115 = arith.constant 0 : index
    %c6_116 = arith.constant 6 : index
    %c0_117 = arith.constant 0 : index
    %204 = vector.load %arg5[%c0_115, %c6_116, %c0_117] : memref<1x10x512xf32, #tpu.memory_space<vmem>>, vector<1x1x512xf32>
    %205 = vector.shape_cast %204 : vector<1x1x512xf32> to vector<1x512xf32>
    %206 = arith.extui %193 : vector<1x512xi1> to vector<1x512xi32>
    %207 = arith.sitofp %206 : vector<1x512xi32> to vector<1x512xf32>
    %cst_118 = arith.constant dense<0.000000e+00> : vector<512xf32>
    %208 = vector.multi_reduction <add>, %207, %cst_118 [0] : vector<1x512xf32> to vector<512xf32>
    %209 = vector.shape_cast %208 : vector<512xf32> to vector<1x512xf32>
    %210 = arith.addf %205, %209 : vector<1x512xf32>
    %c0_119 = arith.constant 0 : index
    %c6_120 = arith.constant 6 : index
    %c0_121 = arith.constant 0 : index
    %211 = vector.load %arg5[%c0_119, %c6_120, %c0_121] : memref<1x10x512xf32, #tpu.memory_space<vmem>>, vector<1x1x512xf32>
    %212 = vector.shape_cast %211 : vector<1x1x512xf32> to vector<1x512xf32>
    %213 = vector.shape_cast %210 : vector<1x512xf32> to vector<1x1x512xf32>
    tpu.vector_store %arg5[%c0_119, %c6_120, %c0_121], %213 {strides = array<i32>} : memref<1x10x512xf32, #tpu.memory_space<vmem>>, vector<1x1x512xf32>,
    %c7_i32 = arith.constant 7 : i32
    %214 = vector.broadcast %c7_i32 : i32 to vector<1x512xi32>
    %215 = arith.cmpi eq, %50, %214 : vector<1x512xi32>
    %c0_122 = arith.constant 0 : index
    %c7 = arith.constant 7 : index
    %c0_123 = arith.constant 0 : index
    %216 = vector.load %arg4[%c0_122, %c7, %c0_123] : memref<1x10x512xf32, #tpu.memory_space<vmem>>, vector<1x1x512xf32>
    %217 = vector.shape_cast %216 : vector<1x1x512xf32> to vector<1x512xf32>
    %cst_124 = arith.constant 0.000000e+00 : f32
    %218 = vector.broadcast %cst_124 : f32 to vector<1x512xf32>
    %219 = arith.select %215, %51, %218 : vector<1x512xi1>, vector<1x512xf32>
    %cst_125 = arith.constant dense<0.000000e+00> : vector<512xf32>
    %220 = vector.multi_reduction <add>, %219, %cst_125 [0] : vector<1x512xf32> to vector<512xf32>
    %221 = vector.shape_cast %220 : vector<512xf32> to vector<1x512xf32>
    %222 = arith.addf %217, %221 : vector<1x512xf32>
    %c0_126 = arith.constant 0 : index
    %c7_127 = arith.constant 7 : index
    %c0_128 = arith.constant 0 : index
    %223 = vector.load %arg4[%c0_126, %c7_127, %c0_128] : memref<1x10x512xf32, #tpu.memory_space<vmem>>, vector<1x1x512xf32>
    %224 = vector.shape_cast %223 : vector<1x1x512xf32> to vector<1x512xf32>
    %225 = vector.shape_cast %222 : vector<1x512xf32> to vector<1x1x512xf32>
    tpu.vector_store %arg4[%c0_126, %c7_127, %c0_128], %225 {strides = array<i32>} : memref<1x10x512xf32, #tpu.memory_space<vmem>>, vector<1x1x512xf32>,
    %c0_129 = arith.constant 0 : index
    %c7_130 = arith.constant 7 : index
    %c0_131 = arith.constant 0 : index
    %226 = vector.load %arg5[%c0_129, %c7_130, %c0_131] : memref<1x10x512xf32, #tpu.memory_space<vmem>>, vector<1x1x512xf32>
    %227 = vector.shape_cast %226 : vector<1x1x512xf32> to vector<1x512xf32>
    %228 = arith.extui %215 : vector<1x512xi1> to vector<1x512xi32>
    %229 = arith.sitofp %228 : vector<1x512xi32> to vector<1x512xf32>
    %cst_132 = arith.constant dense<0.000000e+00> : vector<512xf32>
    %230 = vector.multi_reduction <add>, %229, %cst_132 [0] : vector<1x512xf32> to vector<512xf32>
    %231 = vector.shape_cast %230 : vector<512xf32> to vector<1x512xf32>
    %232 = arith.addf %227, %231 : vector<1x512xf32>
    %c0_133 = arith.constant 0 : index
    %c7_134 = arith.constant 7 : index
    %c0_135 = arith.constant 0 : index
    %233 = vector.load %arg5[%c0_133, %c7_134, %c0_135] : memref<1x10x512xf32, #tpu.memory_space<vmem>>, vector<1x1x512xf32>
    %234 = vector.shape_cast %233 : vector<1x1x512xf32> to vector<1x512xf32>
    %235 = vector.shape_cast %232 : vector<1x512xf32> to vector<1x1x512xf32>
    tpu.vector_store %arg5[%c0_133, %c7_134, %c0_135], %235 {strides = array<i32>} : memref<1x10x512xf32, #tpu.memory_space<vmem>>, vector<1x1x512xf32>,
    %c8_i32 = arith.constant 8 : i32
    %236 = vector.broadcast %c8_i32 : i32 to vector<1x512xi32>
    %237 = arith.cmpi eq, %50, %236 : vector<1x512xi32>
    %c0_136 = arith.constant 0 : index
    %c8 = arith.constant 8 : index
    %c0_137 = arith.constant 0 : index
    %238 = vector.load %arg4[%c0_136, %c8, %c0_137] : memref<1x10x512xf32, #tpu.memory_space<vmem>>, vector<1x1x512xf32>
    %239 = vector.shape_cast %238 : vector<1x1x512xf32> to vector<1x512xf32>
    %cst_138 = arith.constant 0.000000e+00 : f32
    %240 = vector.broadcast %cst_138 : f32 to vector<1x512xf32>
    %241 = arith.select %237, %51, %240 : vector<1x512xi1>, vector<1x512xf32>
    %cst_139 = arith.constant dense<0.000000e+00> : vector<512xf32>
    %242 = vector.multi_reduction <add>, %241, %cst_139 [0] : vector<1x512xf32> to vector<512xf32>
    %243 = vector.shape_cast %242 : vector<512xf32> to vector<1x512xf32>
    %244 = arith.addf %239, %243 : vector<1x512xf32>
    %c0_140 = arith.constant 0 : index
    %c8_141 = arith.constant 8 : index
    %c0_142 = arith.constant 0 : index
    %245 = vector.load %arg4[%c0_140, %c8_141, %c0_142] : memref<1x10x512xf32, #tpu.memory_space<vmem>>, vector<1x1x512xf32>
    %246 = vector.shape_cast %245 : vector<1x1x512xf32> to vector<1x512xf32>
    %247 = vector.shape_cast %244 : vector<1x512xf32> to vector<1x1x512xf32>
    tpu.vector_store %arg4[%c0_140, %c8_141, %c0_142], %247 {strides = array<i32>} : memref<1x10x512xf32, #tpu.memory_space<vmem>>, vector<1x1x512xf32>,
    %c0_143 = arith.constant 0 : index
    %c8_144 = arith.constant 8 : index
    %c0_145 = arith.constant 0 : index
    %248 = vector.load %arg5[%c0_143, %c8_144, %c0_145] : memref<1x10x512xf32, #tpu.memory_space<vmem>>, vector<1x1x512xf32>
    %249 = vector.shape_cast %248 : vector<1x1x512xf32> to vector<1x512xf32>
    %250 = arith.extui %237 : vector<1x512xi1> to vector<1x512xi32>
    %251 = arith.sitofp %250 : vector<1x512xi32> to vector<1x512xf32>
    %cst_146 = arith.constant dense<0.000000e+00> : vector<512xf32>
    %252 = vector.multi_reduction <add>, %251, %cst_146 [0] : vector<1x512xf32> to vector<512xf32>
    %253 = vector.shape_cast %252 : vector<512xf32> to vector<1x512xf32>
    %254 = arith.addf %249, %253 : vector<1x512xf32>
    %c0_147 = arith.constant 0 : index
    %c8_148 = arith.constant 8 : index
    %c0_149 = arith.constant 0 : index
    %255 = vector.load %arg5[%c0_147, %c8_148, %c0_149] : memref<1x10x512xf32, #tpu.memory_space<vmem>>, vector<1x1x512xf32>
    %256 = vector.shape_cast %255 : vector<1x1x512xf32> to vector<1x512xf32>
    %257 = vector.shape_cast %254 : vector<1x512xf32> to vector<1x1x512xf32>
    tpu.vector_store %arg5[%c0_147, %c8_148, %c0_149], %257 {strides = array<i32>} : memref<1x10x512xf32, #tpu.memory_space<vmem>>, vector<1x1x512xf32>,
    %c9_i32_150 = arith.constant 9 : i32
    %258 = vector.broadcast %c9_i32_150 : i32 to vector<1x512xi32>
    %259 = arith.cmpi eq, %50, %258 : vector<1x512xi32>
    %c0_151 = arith.constant 0 : index
    %c9 = arith.constant 9 : index
    %c0_152 = arith.constant 0 : index
    %260 = vector.load %arg4[%c0_151, %c9, %c0_152] : memref<1x10x512xf32, #tpu.memory_space<vmem>>, vector<1x1x512xf32>
    %261 = vector.shape_cast %260 : vector<1x1x512xf32> to vector<1x512xf32>
    %cst_153 = arith.constant 0.000000e+00 : f32
    %262 = vector.broadcast %cst_153 : f32 to vector<1x512xf32>
    %263 = arith.select %259, %51, %262 : vector<1x512xi1>, vector<1x512xf32>
    %cst_154 = arith.constant dense<0.000000e+00> : vector<512xf32>
    %264 = vector.multi_reduction <add>, %263, %cst_154 [0] : vector<1x512xf32> to vector<512xf32>
    %265 = vector.shape_cast %264 : vector<512xf32> to vector<1x512xf32>
    %266 = arith.addf %261, %265 : vector<1x512xf32>
    %c0_155 = arith.constant 0 : index
    %c9_156 = arith.constant 9 : index
    %c0_157 = arith.constant 0 : index
    %267 = vector.load %arg4[%c0_155, %c9_156, %c0_157] : memref<1x10x512xf32, #tpu.memory_space<vmem>>, vector<1x1x512xf32>
    %268 = vector.shape_cast %267 : vector<1x1x512xf32> to vector<1x512xf32>
    %269 = vector.shape_cast %266 : vector<1x512xf32> to vector<1x1x512xf32>
    tpu.vector_store %arg4[%c0_155, %c9_156, %c0_157], %269 {strides = array<i32>} : memref<1x10x512xf32, #tpu.memory_space<vmem>>, vector<1x1x512xf32>,
    %c0_158 = arith.constant 0 : index
    %c9_159 = arith.constant 9 : index
    %c0_160 = arith.constant 0 : index
    %270 = vector.load %arg5[%c0_158, %c9_159, %c0_160] : memref<1x10x512xf32, #tpu.memory_space<vmem>>, vector<1x1x512xf32>
    %271 = vector.shape_cast %270 : vector<1x1x512xf32> to vector<1x512xf32>
    %272 = arith.extui %259 : vector<1x512xi1> to vector<1x512xi32>
    %273 = arith.sitofp %272 : vector<1x512xi32> to vector<1x512xf32>
    %cst_161 = arith.constant dense<0.000000e+00> : vector<512xf32>
    %274 = vector.multi_reduction <add>, %273, %cst_161 [0] : vector<1x512xf32> to vector<512xf32>
    %275 = vector.shape_cast %274 : vector<512xf32> to vector<1x512xf32>
    %276 = arith.addf %271, %275 : vector<1x512xf32>
    %c0_162 = arith.constant 0 : index
    %c9_163 = arith.constant 9 : index
    %c0_164 = arith.constant 0 : index
    %277 = vector.load %arg5[%c0_162, %c9_163, %c0_164] : memref<1x10x512xf32, #tpu.memory_space<vmem>>, vector<1x1x512xf32>
    %278 = vector.shape_cast %277 : vector<1x1x512xf32> to vector<1x512xf32>
    %279 = vector.shape_cast %276 : vector<1x512xf32> to vector<1x1x512xf32>
    tpu.vector_store %arg5[%c0_162, %c9_163, %c0_164], %279 {strides = array<i32>} : memref<1x10x512xf32, #tpu.memory_space<vmem>>, vector<1x1x512xf32>,
    return
  }
  func.func @transform_0(%arg0: i32, %arg1: i32) -> (i32, i32) {
    %c1_i32 = arith.constant 1 : i32
    %0 = arith.muli %arg0, %c1_i32 : i32
    %1 = arith.addi %0, %arg1 : i32
    %c0_i32 = arith.constant 0 : i32
    %c0_i32_0 = arith.constant 0 : i32
    return %1, %c0_i32 : i32, i32
  }
  func.func @transform_1(%arg0: i32, %arg1: i32) -> (i32, i32) {
    %c1_i32 = arith.constant 1 : i32
    %0 = arith.muli %arg0, %c1_i32 : i32
    %1 = arith.addi %0, %arg1 : i32
    %c0_i32 = arith.constant 0 : i32
    %c0_i32_0 = arith.constant 0 : i32
    return %1, %c0_i32 : i32, i32
  }
  func.func @transform_2(%arg0: i32, %arg1: i32) -> (i32, i32, i32) {
    %c0_i32 = arith.constant 0 : i32
    %c0_i32_0 = arith.constant 0 : i32
    %c0_i32_1 = arith.constant 0 : i32
    return %arg0, %c0_i32, %c0_i32_0 : i32, i32, i32
  }
  func.func @transform_3(%arg0: i32, %arg1: i32) -> (i32, i32, i32) {
    %c0_i32 = arith.constant 0 : i32
    %c0_i32_0 = arith.constant 0 : i32
    %c0_i32_1 = arith.constant 0 : i32
    return %arg0, %c0_i32, %c0_i32_0 : i32, i32, i32
  }
  func.func @transform_4(%arg0: i32, %arg1: i32) -> (i32, i32, i32) {
    %c0_i32 = arith.constant 0 : i32
    %c0_i32_0 = arith.constant 0 : i32
    %c0_i32_1 = arith.constant 0 : i32
    return %arg0, %c0_i32, %c0_i32_0 : i32, i32, i32
  }
}

</mosaic_0001>

<llo_original>
// kernel: ghmc_loss.1
$region0: #{ghmc_loss.1}
  #allocation0 [shape = 'u32[]', space=smem, size = 0x4, offset = 0x4, fixed_abs, tag = 'smem constant byte address 0x4 - core index']
  #allocation1 [shape = 'u32[144,128]{1,0:T(1,128)}', space=vmem, size = 0x12000, scoped, tag = 'internal scratch']
  %s0 = inlined_call_operand.vmem [shape: f32[1,512], index: 0, kind: input, shape index: {}]
  %s1 = inlined_call_operand.vmem [shape: f32[1,512], index: 1, kind: input, shape index: {}]
  %s2 = inlined_call_operand.vmem [shape: f32[1,10,512], index: 2, kind: output, shape index: {0}]
  %s3 = inlined_call_operand.vmem [shape: f32[1,10,512], index: 3, kind: output, shape index: {1}]
  %s4 = inlined_call_operand.vmem [shape: f32[1,1,512], index: 4, kind: output, shape index: {2}]
  %5 = xla_tuple %s2, %s3, %s4
  %s6 = sld [smem:[#allocation0]]
  $region38: #{ghmc_loss.1} parent=0
    _
  %s8 = ssub.s32 1, %s6
  %s9 = scalar_select 0, %s8, %s6
  // Predicated region
  $region2: #{ghmc_loss.1} parent=0 // pred_check
    _
  $region3: #{ghmc_loss.1} parent=0 // pred_check_branch
    %11 = sbr.rel (0) target = $region5
  $region4: #{ghmc_loss.1} parent=0 // pred_region
    %s12 = sadd.s32 0, 0
    %p13 = scmp.lt.s32.totalorder %s12, 0
    %s14 = scalar_select %p13, %s12, 0
    %s15 = smul.addr %s14, 4
    %s16 = scalar_lea.vmem %s0, %s15
    %s17 = sadd.s32 0, 0
  $region5: #{ghmc_loss.1} parent=0 // pred_fallthru
    _
  // Predicated region
  $region6: #{ghmc_loss.1} parent=0 // pred_check
    _
  $region7: #{ghmc_loss.1} parent=0 // pred_check_branch
    %19 = sbr.rel (0) target = $region9
  $region8: #{ghmc_loss.1} parent=0 // pred_region
    %s20 = sadd.s32 0, 0
    %p21 = scmp.lt.s32.totalorder %s20, 0
    %s22 = scalar_select %p21, %s20, 0
    %s23 = smul.addr %s22, 4
    %s24 = scalar_lea.vmem %s1, %s23
    %s25 = sadd.s32 0, 0
  $region9: #{ghmc_loss.1} parent=0 // pred_fallthru
    _
  %s26 = sadd.s32 0, 0
  %p27 = scmp.lt.s32.totalorder %s26, 0
  %s28 = scalar_select %p27, %s26, 0
  %s29 = smul.addr %s28, 4
  %s30 = scalar_lea.vmem %s0, %s29
  %s31 = sadd.s32 0, 0
  %p32 = scmp.lt.s32.totalorder %s31, 0
  %s33 = scalar_select %p32, %s31, 0
  %s34 = smul.addr %s33, 4
  %s35 = scalar_lea.vmem %s1, %s34
  %s36 = sadd.s32 0, 0
  %p37 = scmp.lt.s32.totalorder %s36, 0
  %s38 = scalar_select %p37, %s36, 0
  %s39 = smul.addr %s38, 4
  %s40 = scalar_lea.vmem %s0, %s39
  %s41 = sadd.s32 0, 0
  %s42 = sadd.s32 0, 0
  %p43 = scmp.lt.s32.totalorder %s42, 0
  %s44 = scalar_select %p43, %s42, 0
  %s45 = smul.addr %s44, 4
  %s46 = scalar_lea.vmem %s1, %s45
  %s47 = sadd.s32 0, 0
  %p48 = scmp.eq.s32.totalorder 0, 0
  // Predicated region
  $region10: #{ghmc_loss.1} parent=0 // pred_check
    %p49 = pneg %p48
  $region11: #{ghmc_loss.1} parent=0 // pred_check_branch
    %51 = sbr.rel (%p49) target = $region13
  $region12: #{ghmc_loss.1} parent=0 // pred_region
    %52 = vst [vmem:[%s2] sm:$0xff] 0.0
    %53 = vst [vmem:[%s2 + $0x8] sm:$0xff] 0.0
    %54 = vst [vmem:[%s2 + $0x10] sm:$0xff] 0.0
    %55 = vst [vmem:[%s2 + $0x18] sm:$0xff] 0.0
    %56 = vst [vmem:[%s2 + $0x20] sm:$0x3] 0.0
    %57 = vst [vmem:[%s2 + $0x28] sm:$0x3] 0.0
    %58 = vst [vmem:[%s2 + $0x30] sm:$0x3] 0.0
    %59 = vst [vmem:[%s2 + $0x38] sm:$0x3] 0.0
    %60 = vst [vmem:[%s3] sm:$0xff] 0.0
    %61 = vst [vmem:[%s3 + $0x8] sm:$0xff] 0.0
    %62 = vst [vmem:[%s3 + $0x10] sm:$0xff] 0.0
    %63 = vst [vmem:[%s3 + $0x18] sm:$0xff] 0.0
    %64 = vst [vmem:[%s3 + $0x20] sm:$0x3] 0.0
    %65 = vst [vmem:[%s3 + $0x28] sm:$0x3] 0.0
    %66 = vst [vmem:[%s3 + $0x30] sm:$0x3] 0.0
    %67 = vst [vmem:[%s3 + $0x38] sm:$0x3] 0.0
    %v68 = vlaneseq
    %vm69 = vcmp.ge.s32.totalorder %v68, 0
    %vm70 = vcmp.lt.s32.totalorder %v68, 512
    %vm71 = vmand %vm69, %vm70
    %72 = vst.msk [vmem:[%s4] sm:$0xf] %vm71, 0.0
  $region13: #{ghmc_loss.1} parent=0 // pred_fallthru
    _
  %v73 = vld [vmem:[%s40] sm:$0xf]
  %v74 = vld [vmem:[%s46] sm:$0xf]
  %s75 = sadd.s32 0, 0
  %v76 = vlaneseq
  %v77 = vshrl.u32 %v76, 7
  %v78 = vlaneseq
  %v79 = vand.u32 %v78, 127
  %v80 = vadd.s32 %v79, 128
  %v81 = vadd.s32 %v79, 256
  %v82 = vadd.s32 %v79, 384
  %v83 = vstv %s75
  %v84 = vadd.s32 %v83, %v77
  %v85 = vmul.u32 %v84, 512
  %v86 = vadd.s32 %v85, %v79
  %v87 = vadd.s32 %v85, %v80
  %v88 = vadd.s32 %v85, %v81
  %v89 = vadd.s32 %v85, %v82
  %vm90 = vcmp.lt.s32.totalorder %v86, 72
  %vm91 = vcmp.lt.s32.totalorder %v87, 72
  %vm92 = vcmp.lt.s32.totalorder %v88, 72
  %vm93 = vcmp.lt.s32.totalorder %v89, 72
  %vm94 = vcmp.lt.f32.partialorder %v74, -0.5
  %v95 = vsub.f32 -1.0, %v74
  %v96 = vsel %vm94, %v95, %v74
  %v97 = vand.u32 2147483647, %v73
  %v98 = vsub.f32 0.0, %v97
  %v99 = vmul.f32 %v98, 1.442695
  %v100 = vpow.pop %v99
  %v101 = vadd.f32 %v100, 1.0
  %v102 = vlog2.pop %v101
  %v103 = vmul.f32 %v102, 0.6931472
  %v104 = vmul.f32 -0.5, %v100
  %v105 = vadd.f32 %v104, 1.0
  %v106 = vmul.f32 %v105, %v100
  %v107 = vand.u32 2147483647, %v100
  %vm108 = vcmp.lt.f32.partialorder %v107, 0.0004427343
  %v109 = vsel %vm108, %v106, %v103
  %v110 = vmax.f32 %v73, 0.0
  %v111 = vsel %vm94, %v73, 0.0
  %v112 = vsub.f32 %v110, %v111
  %v113 = vadd.f32 %v112, %v109
  %v114 = vadd.f32 %v100, 1.0
  %v115 = vrcp.pop %v114
  %v116 = vmul.f32 1.0, %v115
  %vm117 = vcmp.ge.f32.partialorder %v73, 0.0
  %v118 = vmul.f32 %v100, %v116
  %v119 = vsel %vm117, %v116, %v118
  %v120 = vsub.f32 1.0, %v119
  %v121 = vsel %vm94, %v120, %v119
  %v122 = vmul.f32 %v121, 10.0
  %v123 = vcvt.f32.s32.to.zero.pseudo %v122
  %vm124 = vcmp.lt.s32.totalorder %v123, 9
  %v125 = vsel %vm124, %v123, 9
  %v126 = vlaneseq
  %v127 = vshrl.u32 %v126, 7
  %v128 = vsub.s32 0, %v127
  %v129 = vrot.slane %v125, %v128
  %v130 = vlaneseq
  %v131 = vshrl.u32 %v130, 7
  %v132 = vsub.s32 1, %v131
  %v133 = vrot.slane %v125, %v132
  %v134 = vlaneseq
  %v135 = vshrl.u32 %v134, 7
  %v136 = vsub.s32 2, %v135
  %v137 = vrot.slane %v125, %v136
  %v138 = vlaneseq
  %v139 = vshrl.u32 %v138, 7
  %v140 = vsub.s32 3, %v139
  %v141 = vrot.slane %v125, %v140
  %v142 = vsel %vm90, %v129, 10
  %v143 = vsel %vm91, %v133, 10
  %v144 = vsel %vm92, %v137, 10
  %v145 = vsel %vm93, %v141, 10
  %v146 = vmul.f32 %v96, %v113
  %v147 = vld [vmem:[%s4] sm:$0xf]
  %v148 = vadd.f32 %v96, 0.0
  %v149 = vadd.f32 %v147, %v148
  %v150 = vlaneseq
  %vm151 = vcmp.ge.s32.totalorder %v150, 0
  %vm152 = vcmp.lt.s32.totalorder %v150, 512
  %vm153 = vmand %vm151, %vm152
  %154 = vst.msk [vmem:[%s4] sm:$0xf] %vm153, %v149
  %vm155 = vcmp.eq.s32.totalorder %v142, 0
  %vm156 = vcmp.eq.s32.totalorder %v143, 0
  %vm157 = vcmp.eq.s32.totalorder %v144, 0
  %vm158 = vcmp.eq.s32.totalorder %v145, 0
  %v159 = vld [vmem:[%s2] ss:$8 sm:$0xf]
  %v161 = vlaneseq
  %v162 = vshrl.u32 %v161, 7
  %v163 = vsub.s32 0, %v162
  %v164 = vrot.slane %v146, %v163
  %v165 = vlaneseq
  %v166 = vshrl.u32 %v165, 7
  %v167 = vsub.s32 1, %v166
  %v168 = vrot.slane %v146, %v167
  %v169 = vlaneseq
  %v170 = vshrl.u32 %v169, 7
  %v171 = vsub.s32 2, %v170
  %v172 = vrot.slane %v146, %v171
  %v173 = vlaneseq
  %v174 = vshrl.u32 %v173, 7
  %v175 = vsub.s32 3, %v174
  %v176 = vrot.slane %v146, %v175
  %v181 = vsel %vm155, %v164, 0.0
  %v182 = vsel %vm156, %v168, 0.0
  %v183 = vsel %vm157, %v172, 0.0
  %v184 = vsel %vm158, %v176, 0.0
  %v185 = vadd.f32 %v181, 0.0
  %v186 = vadd.f32 %v182, 0.0
  %v187 = vadd.f32 %v183, 0.0
  %v188 = vadd.f32 %v184, 0.0
  %v193 = vcombine.low %v185, %v186
  %v194 = vcombine.low %v187, %v188
  %v196 = vunpack.c.l.s4 1966171168
  %v197 = vunpack.c.0.s8 %v196
  %v198 = vlaneseq
  %v199 = vshrl.u32 %v198, 7
  %v200 = vsub.s32 %v197, %v199
  %v201 = vrot.slane %v193, %v200
  %v203 = vunpack.c.l.s4 1966171168
  %v204 = vunpack.c.0.s8 %v203
  %v205 = vlaneseq
  %v206 = vshrl.u32 %v205, 7
  %v207 = vsub.s32 %v204, %v206
  %v208 = vrot.slane %v194, %v207
  %v209 = vcombine.low %v201, %v208
  %v211 = vunpack.c.l.s4 1966171168
  %v212 = vunpack.c.0.s8 %v211
  %v213 = vlaneseq
  %v214 = vshrl.u32 %v213, 7
  %v215 = vsub.s32 %v212, %v214
  %v216 = vrot.slane %v209, %v215
  %v218 = vadd.f32 %v159, %v216
  %219 = vst.msk [vmem:[%s2] ss:$8 sm:$0xf] %vm153, %v218
  %220 = vst.msk [vmem:[%s2] ss:$8 sm:$0x0] %vm153, %v218
  %v221 = vld [vmem:[%s3] ss:$8 sm:$0xf]
  %v222 = vsel %vm155, 1, 0
  %v223 = vsel %vm156, 1, 0
  %v224 = vsel %vm157, 1, 0
  %v225 = vsel %vm158, 1, 0
  %v226 = vcvt.s32.f32 %v222
  %v227 = vcvt.s32.f32 %v223
  %v228 = vcvt.s32.f32 %v224
  %v229 = vcvt.s32.f32 %v225
  %v230 = vadd.f32 %v226, 0.0
  %v231 = vadd.f32 %v227, 0.0
  %v232 = vadd.f32 %v228, 0.0
  %v233 = vadd.f32 %v229, 0.0
  %v238 = vcombine.low %v230, %v231
  %v239 = vcombine.low %v232, %v233
  %v241 = vunpack.c.l.s4 1966171168
  %v242 = vunpack.c.0.s8 %v241
  %v243 = vlaneseq
  %v244 = vshrl.u32 %v243, 7
  %v245 = vsub.s32 %v242, %v244
  %v246 = vrot.slane %v238, %v245
  %v248 = vunpack.c.l.s4 1966171168
  %v249 = vunpack.c.0.s8 %v248
  %v250 = vlaneseq
  %v251 = vshrl.u32 %v250, 7
  %v252 = vsub.s32 %v249, %v251
  %v253 = vrot.slane %v239, %v252
  %v254 = vcombine.low %v246, %v253
  %v256 = vunpack.c.l.s4 1966171168
  %v257 = vunpack.c.0.s8 %v256
  %v258 = vlaneseq
  %v259 = vshrl.u32 %v258, 7
  %v260 = vsub.s32 %v257, %v259
  %v261 = vrot.slane %v254, %v260
  %v263 = vadd.f32 %v221, %v261
  %264 = vst.msk [vmem:[%s3] ss:$8 sm:$0xf] %vm153, %v263
  %265 = vst.msk [vmem:[%s3] ss:$8 sm:$0x0] %vm153, %v263
  %vm266 = vcmp.eq.s32.totalorder %v142, 1
  %vm267 = vcmp.eq.s32.totalorder %v143, 1
  %vm268 = vcmp.eq.s32.totalorder %v144, 1
  %vm269 = vcmp.eq.s32.totalorder %v145, 1
  %s270 = scalar_lea.vmem %s2, 1
  %v271 = vld [vmem:[%s270] ss:$8 sm:$0xf]
  %v272 = vsel %vm266, %v164, 0.0
  %v273 = vsel %vm267, %v168, 0.0
  %v274 = vsel %vm268, %v172, 0.0
  %v275 = vsel %vm269, %v176, 0.0
  %v276 = vadd.f32 %v272, 0.0
  %v277 = vadd.f32 %v273, 0.0
  %v278 = vadd.f32 %v274, 0.0
  %v279 = vadd.f32 %v275, 0.0
  %v284 = vcombine.low %v276, %v277
  %v285 = vcombine.low %v278, %v279
  %v287 = vunpack.c.l.s4 1966171168
  %v288 = vunpack.c.0.s8 %v287
  %v289 = vlaneseq
  %v290 = vshrl.u32 %v289, 7
  %v291 = vsub.s32 %v288, %v290
  %v292 = vrot.slane %v284, %v291
  %v294 = vunpack.c.l.s4 1966171168
  %v295 = vunpack.c.0.s8 %v294
  %v296 = vlaneseq
  %v297 = vshrl.u32 %v296, 7
  %v298 = vsub.s32 %v295, %v297
  %v299 = vrot.slane %v285, %v298
  %v300 = vcombine.low %v292, %v299
  %v302 = vunpack.c.l.s4 1966171168
  %v303 = vunpack.c.0.s8 %v302
  %v304 = vlaneseq
  %v305 = vshrl.u32 %v304, 7
  %v306 = vsub.s32 %v303, %v305
  %v307 = vrot.slane %v300, %v306
  %v309 = vadd.f32 %v271, %v307
  %310 = vst.msk [vmem:[%s270] ss:$8 sm:$0xf] %vm153, %v309
  %311 = vst.msk [vmem:[%s270] ss:$8 sm:$0x0] %vm153, %v309
  %s312 = scalar_lea.vmem %s3, 1
  %v313 = vld [vmem:[%s312] ss:$8 sm:$0xf]
  %v314 = vsel %vm266, 1, 0
  %v315 = vsel %vm267, 1, 0
  %v316 = vsel %vm268, 1, 0
  %v317 = vsel %vm269, 1, 0
  %v318 = vcvt.s32.f32 %v314
  %v319 = vcvt.s32.f32 %v315
  %v320 = vcvt.s32.f32 %v316
  %v321 = vcvt.s32.f32 %v317
  %v322 = vadd.f32 %v318, 0.0
  %v323 = vadd.f32 %v319, 0.0
  %v324 = vadd.f32 %v320, 0.0
  %v325 = vadd.f32 %v321, 0.0
  %v330 = vcombine.low %v322, %v323
  %v331 = vcombine.low %v324, %v325
  %v333 = vunpack.c.l.s4 1966171168
  %v334 = vunpack.c.0.s8 %v333
  %v335 = vlaneseq
  %v336 = vshrl.u32 %v335, 7
  %v337 = vsub.s32 %v334, %v336
  %v338 = vrot.slane %v330, %v337
  %v340 = vunpack.c.l.s4 1966171168
  %v341 = vunpack.c.0.s8 %v340
  %v342 = vlaneseq
  %v343 = vshrl.u32 %v342, 7
  %v344 = vsub.s32 %v341, %v343
  %v345 = vrot.slane %v331, %v344
  %v346 = vcombine.low %v338, %v345
  %v348 = vunpack.c.l.s4 1966171168
  %v349 = vunpack.c.0.s8 %v348
  %v350 = vlaneseq
  %v351 = vshrl.u32 %v350, 7
  %v352 = vsub.s32 %v349, %v351
  %v353 = vrot.slane %v346, %v352
  %v355 = vadd.f32 %v313, %v353
  %356 = vst.msk [vmem:[%s312] ss:$8 sm:$0xf] %vm153, %v355
  %357 = vst.msk [vmem:[%s312] ss:$8 sm:$0x0] %vm153, %v355
  %vm358 = vcmp.eq.s32.totalorder %v142, 2
  %vm359 = vcmp.eq.s32.totalorder %v143, 2
  %vm360 = vcmp.eq.s32.totalorder %v144, 2
  %vm361 = vcmp.eq.s32.totalorder %v145, 2
  %s362 = scalar_lea.vmem %s2, 2
  %v363 = vld [vmem:[%s362] ss:$8 sm:$0xf]
  %v364 = vsel %vm358, %v164, 0.0
  %v365 = vsel %vm359, %v168, 0.0
  %v366 = vsel %vm360, %v172, 0.0
  %v367 = vsel %vm361, %v176, 0.0
  %v368 = vadd.f32 %v364, 0.0
  %v369 = vadd.f32 %v365, 0.0
  %v370 = vadd.f32 %v366, 0.0
  %v371 = vadd.f32 %v367, 0.0
  %v376 = vcombine.low %v368, %v369
  %v377 = vcombine.low %v370, %v371
  %v379 = vunpack.c.l.s4 1966171168
  %v380 = vunpack.c.0.s8 %v379
  %v381 = vlaneseq
  %v382 = vshrl.u32 %v381, 7
  %v383 = vsub.s32 %v380, %v382
  %v384 = vrot.slane %v376, %v383
  %v386 = vunpack.c.l.s4 1966171168
  %v387 = vunpack.c.0.s8 %v386
  %v388 = vlaneseq
  %v389 = vshrl.u32 %v388, 7
  %v390 = vsub.s32 %v387, %v389
  %v391 = vrot.slane %v377, %v390
  %v392 = vcombine.low %v384, %v391
  %v394 = vunpack.c.l.s4 1966171168
  %v395 = vunpack.c.0.s8 %v394
  %v396 = vlaneseq
  %v397 = vshrl.u32 %v396, 7
  %v398 = vsub.s32 %v395, %v397
  %v399 = vrot.slane %v392, %v398
  %v401 = vadd.f32 %v363, %v399
  %402 = vst.msk [vmem:[%s362] ss:$8 sm:$0xf] %vm153, %v401
  %403 = vst.msk [vmem:[%s362] ss:$8 sm:$0x0] %vm153, %v401
  %s404 = scalar_lea.vmem %s3, 2
  %v405 = vld [vmem:[%s404] ss:$8 sm:$0xf]
  %v406 = vsel %vm358, 1, 0
  %v407 = vsel %vm359, 1, 0
  %v408 = vsel %vm360, 1, 0
  %v409 = vsel %vm361, 1, 0
  %v410 = vcvt.s32.f32 %v406
  %v411 = vcvt.s32.f32 %v407
  %v412 = vcvt.s32.f32 %v408
  %v413 = vcvt.s32.f32 %v409
  %v414 = vadd.f32 %v410, 0.0
  %v415 = vadd.f32 %v411, 0.0
  %v416 = vadd.f32 %v412, 0.0
  %v417 = vadd.f32 %v413, 0.0
  %v422 = vcombine.low %v414, %v415
  %v423 = vcombine.low %v416, %v417
  %v425 = vunpack.c.l.s4 1966171168
  %v426 = vunpack.c.0.s8 %v425
  %v427 = vlaneseq
  %v428 = vshrl.u32 %v427, 7
  %v429 = vsub.s32 %v426, %v428
  %v430 = vrot.slane %v422, %v429
  %v432 = vunpack.c.l.s4 1966171168
  %v433 = vunpack.c.0.s8 %v432
  %v434 = vlaneseq
  %v435 = vshrl.u32 %v434, 7
  %v436 = vsub.s32 %v433, %v435
  %v437 = vrot.slane %v423, %v436
  %v438 = vcombine.low %v430, %v437
  %v440 = vunpack.c.l.s4 1966171168
  %v441 = vunpack.c.0.s8 %v440
  %v442 = vlaneseq
  %v443 = vshrl.u32 %v442, 7
  %v444 = vsub.s32 %v441, %v443
  %v445 = vrot.slane %v438, %v444
  %v447 = vadd.f32 %v405, %v445
  %448 = vst.msk [vmem:[%s404] ss:$8 sm:$0xf] %vm153, %v447
  %449 = vst.msk [vmem:[%s404] ss:$8 sm:$0x0] %vm153, %v447
  %vm450 = vcmp.eq.s32.totalorder %v142, 3
  %vm451 = vcmp.eq.s32.totalorder %v143, 3
  %vm452 = vcmp.eq.s32.totalorder %v144, 3
  %vm453 = vcmp.eq.s32.totalorder %v145, 3
  %s454 = scalar_lea.vmem %s2, 3
  %v455 = vld [vmem:[%s454] ss:$8 sm:$0xf]
  %v456 = vsel %vm450, %v164, 0.0
  %v457 = vsel %vm451, %v168, 0.0
  %v458 = vsel %vm452, %v172, 0.0
  %v459 = vsel %vm453, %v176, 0.0
  %v460 = vadd.f32 %v456, 0.0
  %v461 = vadd.f32 %v457, 0.0
  %v462 = vadd.f32 %v458, 0.0
  %v463 = vadd.f32 %v459, 0.0
  %v468 = vcombine.low %v460, %v461
  %v469 = vcombine.low %v462, %v463
  %v471 = vunpack.c.l.s4 1966171168
  %v472 = vunpack.c.0.s8 %v471
  %v473 = vlaneseq
  %v474 = vshrl.u32 %v473, 7
  %v475 = vsub.s32 %v472, %v474
  %v476 = vrot.slane %v468, %v475
  %v478 = vunpack.c.l.s4 1966171168
  %v479 = vunpack.c.0.s8 %v478
  %v480 = vlaneseq
  %v481 = vshrl.u32 %v480, 7
  %v482 = vsub.s32 %v479, %v481
  %v483 = vrot.slane %v469, %v482
  %v484 = vcombine.low %v476, %v483
  %v486 = vunpack.c.l.s4 1966171168
  %v487 = vunpack.c.0.s8 %v486
  %v488 = vlaneseq
  %v489 = vshrl.u32 %v488, 7
  %v490 = vsub.s32 %v487, %v489
  %v491 = vrot.slane %v484, %v490
  %v493 = vadd.f32 %v455, %v491
  %494 = vst.msk [vmem:[%s454] ss:$8 sm:$0xf] %vm153, %v493
  %495 = vst.msk [vmem:[%s454] ss:$8 sm:$0x0] %vm153, %v493
  %s496 = scalar_lea.vmem %s3, 3
  %v497 = vld [vmem:[%s496] ss:$8 sm:$0xf]
  %v498 = vsel %vm450, 1, 0
  %v499 = vsel %vm451, 1, 0
  %v500 = vsel %vm452, 1, 0
  %v501 = vsel %vm453, 1, 0
  %v502 = vcvt.s32.f32 %v498
  %v503 = vcvt.s32.f32 %v499
  %v504 = vcvt.s32.f32 %v500
  %v505 = vcvt.s32.f32 %v501
  %v506 = vadd.f32 %v502, 0.0
  %v507 = vadd.f32 %v503, 0.0
  %v508 = vadd.f32 %v504, 0.0
  %v509 = vadd.f32 %v505, 0.0
  %v514 = vcombine.low %v506, %v507
  %v515 = vcombine.low %v508, %v509
  %v517 = vunpack.c.l.s4 1966171168
  %v518 = vunpack.c.0.s8 %v517
  %v519 = vlaneseq
  %v520 = vshrl.u32 %v519, 7
  %v521 = vsub.s32 %v518, %v520
  %v522 = vrot.slane %v514, %v521
  %v524 = vunpack.c.l.s4 1966171168
  %v525 = vunpack.c.0.s8 %v524
  %v526 = vlaneseq
  %v527 = vshrl.u32 %v526, 7
  %v528 = vsub.s32 %v525, %v527
  %v529 = vrot.slane %v515, %v528
  %v530 = vcombine.low %v522, %v529
  %v532 = vunpack.c.l.s4 1966171168
  %v533 = vunpack.c.0.s8 %v532
  %v534 = vlaneseq
  %v535 = vshrl.u32 %v534, 7
  %v536 = vsub.s32 %v533, %v535
  %v537 = vrot.slane %v530, %v536
  %v539 = vadd.f32 %v497, %v537
  %540 = vst.msk [vmem:[%s496] ss:$8 sm:$0xf] %vm153, %v539
  %541 = vst.msk [vmem:[%s496] ss:$8 sm:$0x0] %vm153, %v539
  %vm542 = vcmp.eq.s32.totalorder %v142, 4
  %vm543 = vcmp.eq.s32.totalorder %v143, 4
  %vm544 = vcmp.eq.s32.totalorder %v144, 4
  %vm545 = vcmp.eq.s32.totalorder %v145, 4
  %s546 = scalar_lea.vmem %s2, 4
  %v547 = vld [vmem:[%s546] ss:$8 sm:$0xf]
  %v548 = vsel %vm542, %v164, 0.0
  %v549 = vsel %vm543, %v168, 0.0
  %v550 = vsel %vm544, %v172, 0.0
  %v551 = vsel %vm545, %v176, 0.0
  %v552 = vadd.f32 %v548, 0.0
  %v553 = vadd.f32 %v549, 0.0
  %v554 = vadd.f32 %v550, 0.0
  %v555 = vadd.f32 %v551, 0.0
  %v560 = vcombine.low %v552, %v553
  %v561 = vcombine.low %v554, %v555
  %v563 = vunpack.c.l.s4 1966171168
  %v564 = vunpack.c.0.s8 %v563
  %v565 = vlaneseq
  %v566 = vshrl.u32 %v565, 7
  %v567 = vsub.s32 %v564, %v566
  %v568 = vrot.slane %v560, %v567
  %v570 = vunpack.c.l.s4 1966171168
  %v571 = vunpack.c.0.s8 %v570
  %v572 = vlaneseq
  %v573 = vshrl.u32 %v572, 7
  %v574 = vsub.s32 %v571, %v573
  %v575 = vrot.slane %v561, %v574
  %v576 = vcombine.low %v568, %v575
  %v578 = vunpack.c.l.s4 1966171168
  %v579 = vunpack.c.0.s8 %v578
  %v580 = vlaneseq
  %v581 = vshrl.u32 %v580, 7
  %v582 = vsub.s32 %v579, %v581
  %v583 = vrot.slane %v576, %v582
  %v585 = vadd.f32 %v547, %v583
  %586 = vst.msk [vmem:[%s546] ss:$8 sm:$0xf] %vm153, %v585
  %587 = vst.msk [vmem:[%s546] ss:$8 sm:$0x0] %vm153, %v585
  %s588 = scalar_lea.vmem %s3, 4
  %v589 = vld [vmem:[%s588] ss:$8 sm:$0xf]
  %v590 = vsel %vm542, 1, 0
  %v591 = vsel %vm543, 1, 0
  %v592 = vsel %vm544, 1, 0
  %v593 = vsel %vm545, 1, 0
  %v594 = vcvt.s32.f32 %v590
  %v595 = vcvt.s32.f32 %v591
  %v596 = vcvt.s32.f32 %v592
  %v597 = vcvt.s32.f32 %v593
  %v598 = vadd.f32 %v594, 0.0
  %v599 = vadd.f32 %v595, 0.0
  %v600 = vadd.f32 %v596, 0.0
  %v601 = vadd.f32 %v597, 0.0
  %v606 = vcombine.low %v598, %v599
  %v607 = vcombine.low %v600, %v601
  %v609 = vunpack.c.l.s4 1966171168
  %v610 = vunpack.c.0.s8 %v609
  %v611 = vlaneseq
  %v612 = vshrl.u32 %v611, 7
  %v613 = vsub.s32 %v610, %v612
  %v614 = vrot.slane %v606, %v613
  %v616 = vunpack.c.l.s4 1966171168
  %v617 = vunpack.c.0.s8 %v616
  %v618 = vlaneseq
  %v619 = vshrl.u32 %v618, 7
  %v620 = vsub.s32 %v617, %v619
  %v621 = vrot.slane %v607, %v620
  %v622 = vcombine.low %v614, %v621
  %v624 = vunpack.c.l.s4 1966171168
  %v625 = vunpack.c.0.s8 %v624
  %v626 = vlaneseq
  %v627 = vshrl.u32 %v626, 7
  %v628 = vsub.s32 %v625, %v627
  %v629 = vrot.slane %v622, %v628
  %v631 = vadd.f32 %v589, %v629
  %632 = vst.msk [vmem:[%s588] ss:$8 sm:$0xf] %vm153, %v631
  %633 = vst.msk [vmem:[%s588] ss:$8 sm:$0x0] %vm153, %v631
  %vm634 = vcmp.eq.s32.totalorder %v142, 5
  %vm635 = vcmp.eq.s32.totalorder %v143, 5
  %vm636 = vcmp.eq.s32.totalorder %v144, 5
  %vm637 = vcmp.eq.s32.totalorder %v145, 5
  %s638 = scalar_lea.vmem %s2, 5
  %v639 = vld [vmem:[%s638] ss:$8 sm:$0xf]
  %v640 = vsel %vm634, %v164, 0.0
  %v641 = vsel %vm635, %v168, 0.0
  %v642 = vsel %vm636, %v172, 0.0
  %v643 = vsel %vm637, %v176, 0.0
  %v644 = vadd.f32 %v640, 0.0
  %v645 = vadd.f32 %v641, 0.0
  %v646 = vadd.f32 %v642, 0.0
  %v647 = vadd.f32 %v643, 0.0
  %v652 = vcombine.low %v644, %v645
  %v653 = vcombine.low %v646, %v647
  %v655 = vunpack.c.l.s4 1966171168
  %v656 = vunpack.c.0.s8 %v655
  %v657 = vlaneseq
  %v658 = vshrl.u32 %v657, 7
  %v659 = vsub.s32 %v656, %v658
  %v660 = vrot.slane %v652, %v659
  %v662 = vunpack.c.l.s4 1966171168
  %v663 = vunpack.c.0.s8 %v662
  %v664 = vlaneseq
  %v665 = vshrl.u32 %v664, 7
  %v666 = vsub.s32 %v663, %v665
  %v667 = vrot.slane %v653, %v666
  %v668 = vcombine.low %v660, %v667
  %v670 = vunpack.c.l.s4 1966171168
  %v671 = vunpack.c.0.s8 %v670
  %v672 = vlaneseq
  %v673 = vshrl.u32 %v672, 7
  %v674 = vsub.s32 %v671, %v673
  %v675 = vrot.slane %v668, %v674
  %v677 = vadd.f32 %v639, %v675
  %678 = vst.msk [vmem:[%s638] ss:$8 sm:$0xf] %vm153, %v677
  %679 = vst.msk [vmem:[%s638] ss:$8 sm:$0x0] %vm153, %v677
  %s680 = scalar_lea.vmem %s3, 5
  %v681 = vld [vmem:[%s680] ss:$8 sm:$0xf]
  %v682 = vsel %vm634, 1, 0
  %v683 = vsel %vm635, 1, 0
  %v684 = vsel %vm636, 1, 0
  %v685 = vsel %vm637, 1, 0
  %v686 = vcvt.s32.f32 %v682
  %v687 = vcvt.s32.f32 %v683
  %v688 = vcvt.s32.f32 %v684
  %v689 = vcvt.s32.f32 %v685
  %v690 = vadd.f32 %v686, 0.0
  %v691 = vadd.f32 %v687, 0.0
  %v692 = vadd.f32 %v688, 0.0
  %v693 = vadd.f32 %v689, 0.0
  %v698 = vcombine.low %v690, %v691
  %v699 = vcombine.low %v692, %v693
  %v701 = vunpack.c.l.s4 1966171168
  %v702 = vunpack.c.0.s8 %v701
  %v703 = vlaneseq
  %v704 = vshrl.u32 %v703, 7
  %v705 = vsub.s32 %v702, %v704
  %v706 = vrot.slane %v698, %v705
  %v708 = vunpack.c.l.s4 1966171168
  %v709 = vunpack.c.0.s8 %v708
  %v710 = vlaneseq
  %v711 = vshrl.u32 %v710, 7
  %v712 = vsub.s32 %v709, %v711
  %v713 = vrot.slane %v699, %v712
  %v714 = vcombine.low %v706, %v713
  %v716 = vunpack.c.l.s4 1966171168
  %v717 = vunpack.c.0.s8 %v716
  %v718 = vlaneseq
  %v719 = vshrl.u32 %v718, 7
  %v720 = vsub.s32 %v717, %v719
  %v721 = vrot.slane %v714, %v720
  %v723 = vadd.f32 %v681, %v721
  %724 = vst.msk [vmem:[%s680] ss:$8 sm:$0xf] %vm153, %v723
  %725 = vst.msk [vmem:[%s680] ss:$8 sm:$0x0] %vm153, %v723
  %vm726 = vcmp.eq.s32.totalorder %v142, 6
  %vm727 = vcmp.eq.s32.totalorder %v143, 6
  %vm728 = vcmp.eq.s32.totalorder %v144, 6
  %vm729 = vcmp.eq.s32.totalorder %v145, 6
  %s730 = scalar_lea.vmem %s2, 6
  %v731 = vld [vmem:[%s730] ss:$8 sm:$0xf]
  %v732 = vsel %vm726, %v164, 0.0
  %v733 = vsel %vm727, %v168, 0.0
  %v734 = vsel %vm728, %v172, 0.0
  %v735 = vsel %vm729, %v176, 0.0
  %v736 = vadd.f32 %v732, 0.0
  %v737 = vadd.f32 %v733, 0.0
  %v738 = vadd.f32 %v734, 0.0
  %v739 = vadd.f32 %v735, 0.0
  %v744 = vcombine.low %v736, %v737
  %v745 = vcombine.low %v738, %v739
  %v747 = vunpack.c.l.s4 1966171168
  %v748 = vunpack.c.0.s8 %v747
  %v749 = vlaneseq
  %v750 = vshrl.u32 %v749, 7
  %v751 = vsub.s32 %v748, %v750
  %v752 = vrot.slane %v744, %v751
  %v754 = vunpack.c.l.s4 1966171168
  %v755 = vunpack.c.0.s8 %v754
  %v756 = vlaneseq
  %v757 = vshrl.u32 %v756, 7
  %v758 = vsub.s32 %v755, %v757
  %v759 = vrot.slane %v745, %v758
  %v760 = vcombine.low %v752, %v759
  %v762 = vunpack.c.l.s4 1966171168
  %v763 = vunpack.c.0.s8 %v762
  %v764 = vlaneseq
  %v765 = vshrl.u32 %v764, 7
  %v766 = vsub.s32 %v763, %v765
  %v767 = vrot.slane %v760, %v766
  %v769 = vadd.f32 %v731, %v767
  %770 = vst.msk [vmem:[%s730] ss:$8 sm:$0xf] %vm153, %v769
  %771 = vst.msk [vmem:[%s730] ss:$8 sm:$0x0] %vm153, %v769
  %s772 = scalar_lea.vmem %s3, 6
  %v773 = vld [vmem:[%s772] ss:$8 sm:$0xf]
  %v774 = vsel %vm726, 1, 0
  %v775 = vsel %vm727, 1, 0
  %v776 = vsel %vm728, 1, 0
  %v777 = vsel %vm729, 1, 0
  %v778 = vcvt.s32.f32 %v774
  %v779 = vcvt.s32.f32 %v775
  %v780 = vcvt.s32.f32 %v776
  %v781 = vcvt.s32.f32 %v777
  %v782 = vadd.f32 %v778, 0.0
  %v783 = vadd.f32 %v779, 0.0
  %v784 = vadd.f32 %v780, 0.0
  %v785 = vadd.f32 %v781, 0.0
  %v790 = vcombine.low %v782, %v783
  %v791 = vcombine.low %v784, %v785
  %v793 = vunpack.c.l.s4 1966171168
  %v794 = vunpack.c.0.s8 %v793
  %v795 = vlaneseq
  %v796 = vshrl.u32 %v795, 7
  %v797 = vsub.s32 %v794, %v796
  %v798 = vrot.slane %v790, %v797
  %v800 = vunpack.c.l.s4 1966171168
  %v801 = vunpack.c.0.s8 %v800
  %v802 = vlaneseq
  %v803 = vshrl.u32 %v802, 7
  %v804 = vsub.s32 %v801, %v803
  %v805 = vrot.slane %v791, %v804
  %v806 = vcombine.low %v798, %v805
  %v808 = vunpack.c.l.s4 1966171168
  %v809 = vunpack.c.0.s8 %v808
  %v810 = vlaneseq
  %v811 = vshrl.u32 %v810, 7
  %v812 = vsub.s32 %v809, %v811
  %v813 = vrot.slane %v806, %v812
  %v815 = vadd.f32 %v773, %v813
  %816 = vst.msk [vmem:[%s772] ss:$8 sm:$0xf] %vm153, %v815
  %817 = vst.msk [vmem:[%s772] ss:$8 sm:$0x0] %vm153, %v815
  %vm818 = vcmp.eq.s32.totalorder %v142, 7
  %vm819 = vcmp.eq.s32.totalorder %v143, 7
  %vm820 = vcmp.eq.s32.totalorder %v144, 7
  %vm821 = vcmp.eq.s32.totalorder %v145, 7
  %s822 = scalar_lea.vmem %s2, 7
  %v823 = vld [vmem:[%s822] ss:$8 sm:$0xf]
  %v824 = vsel %vm818, %v164, 0.0
  %v825 = vsel %vm819, %v168, 0.0
  %v826 = vsel %vm820, %v172, 0.0
  %v827 = vsel %vm821, %v176, 0.0
  %v828 = vadd.f32 %v824, 0.0
  %v829 = vadd.f32 %v825, 0.0
  %v830 = vadd.f32 %v826, 0.0
  %v831 = vadd.f32 %v827, 0.0
  %v836 = vcombine.low %v828, %v829
  %v837 = vcombine.low %v830, %v831
  %v839 = vunpack.c.l.s4 1966171168
  %v840 = vunpack.c.0.s8 %v839
  %v841 = vlaneseq
  %v842 = vshrl.u32 %v841, 7
  %v843 = vsub.s32 %v840, %v842
  %v844 = vrot.slane %v836, %v843
  %v846 = vunpack.c.l.s4 1966171168
  %v847 = vunpack.c.0.s8 %v846
  %v848 = vlaneseq
  %v849 = vshrl.u32 %v848, 7
  %v850 = vsub.s32 %v847, %v849
  %v851 = vrot.slane %v837, %v850
  %v852 = vcombine.low %v844, %v851
  %v854 = vunpack.c.l.s4 1966171168
  %v855 = vunpack.c.0.s8 %v854
  %v856 = vlaneseq
  %v857 = vshrl.u32 %v856, 7
  %v858 = vsub.s32 %v855, %v857
  %v859 = vrot.slane %v852, %v858
  %v861 = vadd.f32 %v823, %v859
  %862 = vst.msk [vmem:[%s822] ss:$8 sm:$0xf] %vm153, %v861
  %863 = vst.msk [vmem:[%s822] ss:$8 sm:$0x0] %vm153, %v861
  %s864 = scalar_lea.vmem %s3, 7
  %v865 = vld [vmem:[%s864] ss:$8 sm:$0xf]
  %v866 = vsel %vm818, 1, 0
  %v867 = vsel %vm819, 1, 0
  %v868 = vsel %vm820, 1, 0
  %v869 = vsel %vm821, 1, 0
  %v870 = vcvt.s32.f32 %v866
  %v871 = vcvt.s32.f32 %v867
  %v872 = vcvt.s32.f32 %v868
  %v873 = vcvt.s32.f32 %v869
  %v874 = vadd.f32 %v870, 0.0
  %v875 = vadd.f32 %v871, 0.0
  %v876 = vadd.f32 %v872, 0.0
  %v877 = vadd.f32 %v873, 0.0
  %v882 = vcombine.low %v874, %v875
  %v883 = vcombine.low %v876, %v877
  %v885 = vunpack.c.l.s4 1966171168
  %v886 = vunpack.c.0.s8 %v885
  %v887 = vlaneseq
  %v888 = vshrl.u32 %v887, 7
  %v889 = vsub.s32 %v886, %v888
  %v890 = vrot.slane %v882, %v889
  %v892 = vunpack.c.l.s4 1966171168
  %v893 = vunpack.c.0.s8 %v892
  %v894 = vlaneseq
  %v895 = vshrl.u32 %v894, 7
  %v896 = vsub.s32 %v893, %v895
  %v897 = vrot.slane %v883, %v896
  %v898 = vcombine.low %v890, %v897
  %v900 = vunpack.c.l.s4 1966171168
  %v901 = vunpack.c.0.s8 %v900
  %v902 = vlaneseq
  %v903 = vshrl.u32 %v902, 7
  %v904 = vsub.s32 %v901, %v903
  %v905 = vrot.slane %v898, %v904
  %v907 = vadd.f32 %v865, %v905
  %908 = vst.msk [vmem:[%s864] ss:$8 sm:$0xf] %vm153, %v907
  %909 = vst.msk [vmem:[%s864] ss:$8 sm:$0x0] %vm153, %v907
  %vm910 = vcmp.eq.s32.totalorder %v142, 8
  %vm911 = vcmp.eq.s32.totalorder %v143, 8
  %vm912 = vcmp.eq.s32.totalorder %v144, 8
  %vm913 = vcmp.eq.s32.totalorder %v145, 8
  %s914 = scalar_lea.vmem %s2, 32
  %v915 = vld [vmem:[%s914] ss:$8 sm:$0xf]
  %v916 = vsel %vm910, %v164, 0.0
  %v917 = vsel %vm911, %v168, 0.0
  %v918 = vsel %vm912, %v172, 0.0
  %v919 = vsel %vm913, %v176, 0.0
  %v920 = vadd.f32 %v916, 0.0
  %v921 = vadd.f32 %v917, 0.0
  %v922 = vadd.f32 %v918, 0.0
  %v923 = vadd.f32 %v919, 0.0
  %v928 = vcombine.low %v920, %v921
  %v929 = vcombine.low %v922, %v923
  %v931 = vunpack.c.l.s4 1966171168
  %v932 = vunpack.c.0.s8 %v931
  %v933 = vlaneseq
  %v934 = vshrl.u32 %v933, 7
  %v935 = vsub.s32 %v932, %v934
  %v936 = vrot.slane %v928, %v935
  %v938 = vunpack.c.l.s4 1966171168
  %v939 = vunpack.c.0.s8 %v938
  %v940 = vlaneseq
  %v941 = vshrl.u32 %v940, 7
  %v942 = vsub.s32 %v939, %v941
  %v943 = vrot.slane %v929, %v942
  %v944 = vcombine.low %v936, %v943
  %v946 = vunpack.c.l.s4 1966171168
  %v947 = vunpack.c.0.s8 %v946
  %v948 = vlaneseq
  %v949 = vshrl.u32 %v948, 7
  %v950 = vsub.s32 %v947, %v949
  %v951 = vrot.slane %v944, %v950
  %v953 = vadd.f32 %v915, %v951
  %954 = vst.msk [vmem:[%s914] ss:$8 sm:$0xf] %vm153, %v953
  %955 = vst.msk [vmem:[%s914] ss:$8 sm:$0x0] %vm153, %v953
  %s956 = scalar_lea.vmem %s3, 32
  %v957 = vld [vmem:[%s956] ss:$8 sm:$0xf]
  %v958 = vsel %vm910, 1, 0
  %v959 = vsel %vm911, 1, 0
  %v960 = vsel %vm912, 1, 0
  %v961 = vsel %vm913, 1, 0
  %v962 = vcvt.s32.f32 %v958
  %v963 = vcvt.s32.f32 %v959
  %v964 = vcvt.s32.f32 %v960
  %v965 = vcvt.s32.f32 %v961
  %v966 = vadd.f32 %v962, 0.0
  %v967 = vadd.f32 %v963, 0.0
  %v968 = vadd.f32 %v964, 0.0
  %v969 = vadd.f32 %v965, 0.0
  %v974 = vcombine.low %v966, %v967
  %v975 = vcombine.low %v968, %v969
  %v977 = vunpack.c.l.s4 1966171168
  %v978 = vunpack.c.0.s8 %v977
  %v979 = vlaneseq
  %v980 = vshrl.u32 %v979, 7
  %v981 = vsub.s32 %v978, %v980
  %v982 = vrot.slane %v974, %v981
  %v984 = vunpack.c.l.s4 1966171168
  %v985 = vunpack.c.0.s8 %v984
  %v986 = vlaneseq
  %v987 = vshrl.u32 %v986, 7
  %v988 = vsub.s32 %v985, %v987
  %v989 = vrot.slane %v975, %v988
  %v990 = vcombine.low %v982, %v989
  %v992 = vunpack.c.l.s4 1966171168
  %v993 = vunpack.c.0.s8 %v992
  %v994 = vlaneseq
  %v995 = vshrl.u32 %v994, 7
  %v996 = vsub.s32 %v993, %v995
  %v997 = vrot.slane %v990, %v996
  %v999 = vadd.f32 %v957, %v997
  %1000 = vst.msk [vmem:[%s956] ss:$8 sm:$0xf] %vm153, %v999
  %1001 = vst.msk [vmem:[%s956] ss:$8 sm:$0x0] %vm153, %v999
  %vm1002 = vcmp.eq.s32.totalorder %v142, 9
  %vm1003 = vcmp.eq.s32.totalorder %v143, 9
  %vm1004 = vcmp.eq.s32.totalorder %v144, 9
  %vm1005 = vcmp.eq.s32.totalorder %v145, 9
  %s1006 = scalar_lea.vmem %s2, 33
  %v1007 = vld [vmem:[%s1006] ss:$8 sm:$0xf]
  %v1008 = vsel %vm1002, %v164, 0.0
  %v1009 = vsel %vm1003, %v168, 0.0
  %v1010 = vsel %vm1004, %v172, 0.0
  %v1011 = vsel %vm1005, %v176, 0.0
  %v1012 = vadd.f32 %v1008, 0.0
  %v1013 = vadd.f32 %v1009, 0.0
  %v1014 = vadd.f32 %v1010, 0.0
  %v1015 = vadd.f32 %v1011, 0.0
  %v1020 = vcombine.low %v1012, %v1013
  %v1021 = vcombine.low %v1014, %v1015
  %v1023 = vunpack.c.l.s4 1966171168
  %v1024 = vunpack.c.0.s8 %v1023
  %v1025 = vlaneseq
  %v1026 = vshrl.u32 %v1025, 7
  %v1027 = vsub.s32 %v1024, %v1026
  %v1028 = vrot.slane %v1020, %v1027
  %v1030 = vunpack.c.l.s4 1966171168
  %v1031 = vunpack.c.0.s8 %v1030
  %v1032 = vlaneseq
  %v1033 = vshrl.u32 %v1032, 7
  %v1034 = vsub.s32 %v1031, %v1033
  %v1035 = vrot.slane %v1021, %v1034
  %v1036 = vcombine.low %v1028, %v1035
  %v1038 = vunpack.c.l.s4 1966171168
  %v1039 = vunpack.c.0.s8 %v1038
  %v1040 = vlaneseq
  %v1041 = vshrl.u32 %v1040, 7
  %v1042 = vsub.s32 %v1039, %v1041
  %v1043 = vrot.slane %v1036, %v1042
  %v1045 = vadd.f32 %v1007, %v1043
  %1046 = vst.msk [vmem:[%s1006] ss:$8 sm:$0xf] %vm153, %v1045
  %1047 = vst.msk [vmem:[%s1006] ss:$8 sm:$0x0] %vm153, %v1045
  %s1048 = scalar_lea.vmem %s3, 33
  %v1049 = vld [vmem:[%s1048] ss:$8 sm:$0xf]
  %v1050 = vsel %vm1002, 1, 0
  %v1051 = vsel %vm1003, 1, 0
  %v1052 = vsel %vm1004, 1, 0
  %v1053 = vsel %vm1005, 1, 0
  %v1054 = vcvt.s32.f32 %v1050
  %v1055 = vcvt.s32.f32 %v1051
  %v1056 = vcvt.s32.f32 %v1052
  %v1057 = vcvt.s32.f32 %v1053
  %v1058 = vadd.f32 %v1054, 0.0
  %v1059 = vadd.f32 %v1055, 0.0
  %v1060 = vadd.f32 %v1056, 0.0
  %v1061 = vadd.f32 %v1057, 0.0
  %v1066 = vcombine.low %v1058, %v1059
  %v1067 = vcombine.low %v1060, %v1061
  %v1069 = vunpack.c.l.s4 1966171168
  %v1070 = vunpack.c.0.s8 %v1069
  %v1071 = vlaneseq
  %v1072 = vshrl.u32 %v1071, 7
  %v1073 = vsub.s32 %v1070, %v1072
  %v1074 = vrot.slane %v1066, %v1073
  %v1076 = vunpack.c.l.s4 1966171168
  %v1077 = vunpack.c.0.s8 %v1076
  %v1078 = vlaneseq
  %v1079 = vshrl.u32 %v1078, 7
  %v1080 = vsub.s32 %v1077, %v1079
  %v1081 = vrot.slane %v1067, %v1080
  %v1082 = vcombine.low %v1074, %v1081
  %v1084 = vunpack.c.l.s4 1966171168
  %v1085 = vunpack.c.0.s8 %v1084
  %v1086 = vlaneseq
  %v1087 = vshrl.u32 %v1086, 7
  %v1088 = vsub.s32 %v1085, %v1087
  %v1089 = vrot.slane %v1082, %v1088
  %v1091 = vadd.f32 %v1049, %v1089
  %1092 = vst.msk [vmem:[%s1048] ss:$8 sm:$0xf] %vm153, %v1091
  %1093 = vst.msk [vmem:[%s1048] ss:$8 sm:$0x0] %vm153, %v1091
  // Predicated region
  $region14: #{ghmc_loss.1} parent=0 // pred_check
    _
  $region15: #{ghmc_loss.1} parent=0 // pred_check_branch
    %1095 = sbr.rel (0) target = $region17
  $region16: #{ghmc_loss.1} parent=0 // pred_region
    _
  $region17: #{ghmc_loss.1} parent=0 // pred_fallthru
    _
  // Predicated region
  $region18: #{ghmc_loss.1} parent=0 // pred_check
    _
  $region19: #{ghmc_loss.1} parent=0 // pred_check_branch
    %1097 = sbr.rel (0) target = $region21
  $region20: #{ghmc_loss.1} parent=0 // pred_region
    _
  $region21: #{ghmc_loss.1} parent=0 // pred_fallthru
    _
  // Predicated region
  $region22: #{ghmc_loss.1} parent=0 // pred_check
    _
  $region23: #{ghmc_loss.1} parent=0 // pred_check_branch
    %1099 = sbr.rel (0) target = $region25
  $region24: #{ghmc_loss.1} parent=0 // pred_region
    _
  $region25: #{ghmc_loss.1} parent=0 // pred_fallthru
    _
  // Predicated region
  $region26: #{ghmc_loss.1} parent=0 // pred_check
    _
  $region27: #{ghmc_loss.1} parent=0 // pred_check_branch
    %1101 = sbr.rel (0) target = $region29
  $region28: #{ghmc_loss.1} parent=0 // pred_region
    _
  $region29: #{ghmc_loss.1} parent=0 // pred_fallthru
    _
  // Predicated region
  $region30: #{ghmc_loss.1} parent=0 // pred_check
    _
  $region31: #{ghmc_loss.1} parent=0 // pred_check_branch
    %1103 = sbr.rel (0) target = $region33
  $region32: #{ghmc_loss.1} parent=0 // pred_region
    _
  $region33: #{ghmc_loss.1} parent=0 // pred_fallthru
    _
  // Predicated region
  $region34: #{ghmc_loss.1} parent=0 // pred_check
    _
  $region35: #{ghmc_loss.1} parent=0 // pred_check_branch
    %1105 = sbr.rel (0) target = $region37
  $region36: #{ghmc_loss.1} parent=0 // pred_region
    _
  $region37: #{ghmc_loss.1} parent=0 // pred_fallthru
    _

</llo_original>
